<compile_context>
chip_gen: v6e
topology: v6e:2x2x1
jax: 0.10.0
libtpu: 0.0.40
codegen_flags: <defaults>
</compile_context>

<pallas_src>
import functools

import jax
import jax.numpy as jnp
from jax.experimental import pallas as pl
from jax.experimental.pallas import tpu as pltpu

LEAKY_SLOPE = 0.01          # nn.LeakyReLU default negative_slope
BN_EPS = 1e-5               # nn.BatchNorm2d default eps
LANE = 128                  # TPU lane width


def _round_up(x, m):
    return (x + m - 1) // m * m


_VMEM_LIMIT = None


def _vmem_limit_bytes():
    """Per-generation VMEM budget: half of physical capacity, capped at 64 MiB
    (=> ~32 MiB on v7x's 64 MiB/TC, 64 MiB on v5e/v6e's 128 MiB)."""
    global _VMEM_LIMIT
    if _VMEM_LIMIT is None:
        cap = 128 * 1024 * 1024
        try:
            cap = int(pltpu.get_tpu_info().vmem_capacity_bytes)
        except Exception:
            pass
        _VMEM_LIMIT = int(min(cap // 2, 64 * 1024 * 1024))
    return _VMEM_LIMIT


def _kp_tk(k):
    """(padded K, K tile). Small K: single full-K step, no padding. Large K: 512 tiles."""
    if k <= 512:
        return k, k
    if k <= 1024:
        kp = _round_up(k, 128)
        return kp, kp
    kp = _round_up(k, 512)
    return kp, 512


def _choose_tiles(m, np_):
    """Adaptive (TM, Mp, TN): large tiles for large-M layers, tiny tiles for the
    deep small-M layers, and >=2 parallel blocks when possible (v7x megacore)."""
    tn = 256 if np_ % 256 == 0 else 128
    tm = 512 if m >= 4096 else min(256, _round_up(m, 16))
    mp = _round_up(m, tm)
    if (mp // tm) * (np_ // tn) < 2:
        if np_ // LANE >= 2:
            tn = LANE
        elif tm >= 32:
            tm = _round_up((m + 1) // 2, 16)
            mp = _round_up(m, tm)
    return tm, mp, tn


# ----------------------------------------------------------------------------
# Kernel 1: tiled matmul with f32 VMEM accumulator (1x1 convs, stride-2 im2col,
#           and the two halves of the fused upsampling conv).
#   mode == "act":    y = leaky(A@B + bias)
#   mode == "linear": y = A@B                       (upsample branch, no epilogue)
#   mode == "preadd": y = leaky(A@B + bias + extra) (fused upsample+concat conv)
# ----------------------------------------------------------------------------
def _mm_kernel(*refs, mode):
    if mode == "linear":
        a_ref, b_ref, o_ref, acc_ref = refs
        bias_ref = extra_ref = None
    elif mode == "preadd":
        a_ref, b_ref, bias_ref, extra_ref, o_ref, acc_ref = refs
    else:  # "act"
        a_ref, b_ref, bias_ref, o_ref, acc_ref = refs
        extra_ref = None

    @pl.when(pl.program_id(2) == 0)
    def _():
        acc_ref[...] = jnp.zeros_like(acc_ref)

    acc_ref[...] += jnp.dot(a_ref[...], b_ref[...],
                            preferred_element_type=jnp.float32)

    @pl.when(pl.program_id(2) == pl.num_programs(2) - 1)
    def _():
        y = acc_ref[...]
        if mode != "linear":
            y = y + bias_ref[...]
        if mode == "preadd":
            y = y + extra_ref[...].astype(jnp.float32)
        if mode != "linear":
            y = jnp.maximum(y, LEAKY_SLOPE * y)      # LeakyReLU as one VALU max
        o_ref[...] = y.astype(o_ref.dtype)


def fused_conv_matmul(a, w, bias=None, extra=None, mode="act"):
    """a: (M, K) bf16; w: (Kp, Np) bf16 (BN scale folded, zero-padded);
       bias: (1, Np) f32; extra: (M, Np) bf16 (mode='preadd').
       Returns (M, Np) bf16."""
    m, k = a.shape
    kp, tk = _kp_tk(k)
    np_ = w.shape[1]
    assert w.shape[0] == kp, (w.shape, kp)
    tm, mp, tn = _choose_tiles(m, np_)

    if kp > k:
        a = jnp.pad(a, ((0, 0), (0, kp - k)))
    if mp > m:
        a = jnp.pad(a, ((0, mp - m), (0, 0)))

    args = [a, w]
    in_specs = [pl.BlockSpec((tm, tk), lambda i, j, kk: (i, kk)),
                pl.BlockSpec((tk, tn), lambda i, j, kk: (kk, j))]
    if mode != "linear":
        args.append(bias)
        in_specs.append(pl.BlockSpec((1, tn), lambda i, j, kk: (0, j)))
    if mode == "preadd":
        e = extra if mp == m else jnp.pad(extra, ((0, mp - m), (0, 0)))
        args.append(e)
        in_specs.append(pl.BlockSpec((tm, tn), lambda i, j, kk: (i, j)))

    bytes_accessed = (mp * kp + kp * np_ + mp * np_) * 2 + np_ * 4
    if mode == "preadd":
        bytes_accessed += mp * np_ * 2

    out = pl.pallas_call(
        functools.partial(_mm_kernel, mode=mode),
        out_shape=jax.ShapeDtypeStruct((mp, np_), jnp.bfloat16),
        grid_spec=pltpu.PrefetchScalarGridSpec(
            num_scalar_prefetch=0,
            grid=(mp // tm, np_ // tn, kp // tk),
            in_specs=in_specs,
            out_specs=pl.BlockSpec((tm, tn), lambda i, j, kk: (i, j)),
            scratch_shapes=[pltpu.VMEM((tm, tn), jnp.float32)],
        ),
        compiler_params=pltpu.CompilerParams(
            dimension_semantics=("parallel", "parallel", "arbitrary"),
            vmem_limit_bytes=_vmem_limit_bytes(),
        ),
        cost_estimate=pl.CostEstimate(flops=2 * mp * np_ * kp, transcendentals=0,
                                      bytes_accessed=bytes_accessed),
    )(*args)
    return out[:m] if mp > m else out


# ----------------------------------------------------------------------------
# Kernel 2: direct 3x3 stride-1 conv (no HBM im2col).
# Grid = (Cout tiles, N, H, 3 kh-taps); one step = one output image row.
# The 3 kw taps are accumulated in-kernel from the padded NHWC row; the residual
# (bottleneck skip) is fused into the epilogue.
# ----------------------------------------------------------------------------
def _conv3_kernel(*refs, cin, wo, has_res):
    if has_res:
        x_ref, w_ref, b_ref, r_ref, o_ref, acc_ref = refs
    else:
        x_ref, w_ref, b_ref, o_ref, acc_ref = refs
        r_ref = None
    kh = pl.program_id(3)

    @pl.when(kh == 0)
    def _():
        acc_ref[...] = jnp.zeros_like(acc_ref)

    for kw in range(3):
        a = x_ref[0, 0, kw:kw + wo, :]                # (Wo, Cin) bf16
        b = w_ref[kh * 3 + kw]                        # (Cin, TN) bf16
        acc_ref[...] += jnp.dot(a, b, preferred_element_type=jnp.float32)

    @pl.when(kh == 2)
    def _():
        y = acc_ref[...] + b_ref[...]
        y = jnp.maximum(y, LEAKY_SLOPE * y)
        if has_res:
            y = y + r_ref[0, 0, :, :].astype(jnp.float32)
        o_ref[0, 0, :, :] = y.astype(o_ref.dtype)


def conv3x3_s1_direct(x, p, residual=None):
    """3x3 stride-1 conv + BN + LeakyReLU (+ fused residual), reading the padded
    NHWC activation directly. x: (N,H,W,Cin) bf16 -> (N,H,W,Np) bf16."""
    n, h, w, cin = x.shape
    np_ = p["np"]
    tn = 256 if np_ % 256 == 0 else 128
    xp = jnp.pad(x, ((0, 0), (1, 1), (1, 1), (0, 0)))
    wp = w + 2

    args = [xp, p["w3"], p["bias"]]
    in_specs = [
        pl.BlockSpec((1, 1, wp, cin), lambda j, b, i, kh: (b, i + kh, 0, 0)),
        pl.BlockSpec((9, cin, tn), lambda j, b, i, kh: (0, 0, j)),
        pl.BlockSpec((1, tn), lambda j, b, i, kh: (0, j)),
    ]
    has_res = residual is not None
    if has_res:
        args.append(residual)
        in_specs.append(pl.BlockSpec((1, 1, w, tn), lambda j, b, i, kh: (b, i, 0, j)))

    bytes_accessed = (3 * n * (h + 2) * wp * cin + 9 * cin * np_
                      + n * h * w * np_ * (2 if has_res else 1)) * 2 + np_ * 4

    return pl.pallas_call(
        functools.partial(_conv3_kernel, cin=cin, wo=w, has_res=has_res),
        out_shape=jax.ShapeDtypeStruct((n, h, w, np_), jnp.bfloat16),
        grid_spec=pltpu.PrefetchScalarGridSpec(
            num_scalar_prefetch=0,
            grid=(np_ // tn, n, h, 3),
            in_specs=in_specs,
            out_specs=pl.BlockSpec((1, 1, w, tn), lambda j, b, i, kh: (b, i, 0, j)),
            scratch_shapes=[pltpu.VMEM((w, tn), jnp.float32)],
        ),
        compiler_params=pltpu.CompilerParams(
            dimension_semantics=("parallel", "parallel", "parallel", "arbitrary"),
            vmem_limit_bytes=_vmem_limit_bytes(),
        ),
        cost_estimate=pl.CostEstimate(flops=2 * n * h * w * 9 * cin * np_,
                                      transcendentals=0,
                                      bytes_accessed=bytes_accessed),
    )(*args)


# ----------------------------------------------------------------------------
# Glue: im2col (only 1x1 convs and stride-2 downsamples), upsample, parameters
# ----------------------------------------------------------------------------
def im2col(x, ksize, stride, padding, k_padded):
    """x: (N, H, W, C) bf16 -> ((N*Ho*Wo, k_padded) bf16, (N, Ho, Wo))."""
    n, h, w, c = x.shape
    if padding > 0:
        x = jnp.pad(x, ((0, 0), (padding, padding), (padding, padding), (0, 0)))
    ho = (h + 2 * padding - ksize) // stride + 1
    wo = (w + 2 * padding - ksize) // stride + 1
    if ksize == 1 and stride == 1:
        patches = x                                   # 1x1 conv: pure reshape
    else:
        cols = []
        for kh in range(ksize):
            for kw in range(ksize):
                cols.append(x[:, kh:kh + stride * ho:stride,
                              kw:kw + stride * wo:stride, :])
        patches = jnp.concatenate(cols, axis=-1)      # order (kh, kw, c)
    patches = patches.reshape(n * ho * wo, ksize * ksize * c)
    k = ksize * ksize * c
    if k_padded > k:
        patches = jnp.pad(patches, ((0, 0), (0, k_padded - k)))
    return patches, (n, ho, wo)


def upsample_nearest2(x):
    x = jnp.repeat(x, 2, axis=1)
    return jnp.repeat(x, 2, axis=2)


class ParamBuilder:
    def __init__(self, key):
        self.key = key

    def next(self):
        self.key, k = jax.random.split(self.key)
        return k


def _bn_fold(kg, kb, cout):
    gamma = 1.0 + 0.1 * jax.random.normal(kg, (cout,), jnp.float32)
    beta = 0.1 * jax.random.normal(kb, (cout,), jnp.float32)
    running_mean = jnp.zeros((cout,), jnp.float32)
    running_var = jnp.ones((cout,), jnp.float32)
    scale = gamma / jnp.sqrt(running_var + BN_EPS)
    bias = beta - running_mean * scale
    return scale, bias


def make_conv(pb, cin, cout, k=3, stride=1, pad=1):
    """DarknetConvBlock params: conv (no bias) + folded eval-mode BN + leaky."""
    kw_, kg, kb = jax.random.split(pb.next(), 3)
    fan_in = cin * k * k
    w = jax.random.normal(kw_, (k, k, cin, cout), jnp.float32) / jnp.sqrt(float(fan_in))
    scale, bias = _bn_fold(kg, kb, cout)

    np_ = _round_up(cout, LANE)
    bias_pad = jnp.pad(bias, (0, np_ - cout))[None, :].astype(jnp.float32)
    wmat = w.reshape(k * k * cin, cout) * scale[None, :]          # fold BN scale
    wmat = jnp.pad(wmat, ((0, 0), (0, np_ - cout)))

    p = {"k": k, "stride": stride, "pad": pad, "cin": cin, "cout": cout,
         "np": np_, "bias": bias_pad}
    if k == 3 and stride == 1 and cin % 8 == 0:
        p["mode"] = "direct3"                                     # direct NHWC kernel
        p["w3"] = wmat.reshape(9, cin, np_).astype(jnp.bfloat16)  # (kh*3+kw, cin, Np)
    else:
        kdim = k * k * cin
        kp, _ = _kp_tk(kdim)
        p["mode"] = "matmul"
        p["kp"] = kp
        p["w"] = jnp.pad(wmat, ((0, kp - kdim), (0, 0))).astype(jnp.bfloat16)
    return p


def make_split_conv1x1(pb, c_up, c_res, cout):
    """First conv of an upsampling loop: 1x1 over concat(upsample(x_in), x_res),
    stored as two row-blocks so x_up / x_cat never hit HBM."""
    k1, k2, kg, kb = jax.random.split(pb.next(), 4)
    fan_in = c_up + c_res
    w_up = jax.random.normal(k1, (c_up, cout), jnp.float32) / jnp.sqrt(float(fan_in))
    w_res = jax.random.normal(k2, (c_res, cout), jnp.float32) / jnp.sqrt(float(fan_in))
    scale, bias = _bn_fold(kg, kb, cout)
    np_ = _round_up(cout, LANE)

    def prep(wm, kdim):
        kp, _ = _kp_tk(kdim)
        wm = wm * scale[None, :]
        wm = jnp.pad(wm, ((0, kp - kdim), (0, np_ - cout)))
        return wm.astype(jnp.bfloat16)

    return {"w_up": prep(w_up, c_up), "w_res": prep(w_res, c_res),
            "bias": jnp.pad(bias, (0, np_ - cout))[None, :].astype(jnp.float32),
            "cout": cout, "np": np_}


def apply_conv_block(x, p):
    if p["mode"] == "direct3":
        out = conv3x3_s1_direct(x, p)
        return out[..., :p["cout"]] if p["np"] > p["cout"] else out
    patches, (n, ho, wo) = im2col(x, p["k"], p["stride"], p["pad"], p["kp"])
    out = fused_conv_matmul(patches, p["w"], p["bias"], mode="act")
    if p["np"] > p["cout"]:
        out = out[:, :p["cout"]]
    return out.reshape(n, ho, wo, p["cout"])


def apply_bottleneck(x, c1, c2):
    """x + conv2(conv1(x)); residual add fused into the direct 3x3 kernel."""
    x1 = apply_conv_block(x, c1)
    cout, np_ = c2["cout"], c2["np"]
    res = x if np_ == cout else jnp.pad(x, ((0, 0), (0, 0), (0, 0), (0, np_ - cout)))
    out = conv3x3_s1_direct(x1, c2, residual=res)
    return out[..., :cout] if np_ > cout else out


# ----------------------------------------------------------------------------
# Darknet structure (mirrors the PyTorch constructors)
# ----------------------------------------------------------------------------
def make_block(pb, cin, cout, rep):
    blk = {"down": make_conv(pb, cin, cout, 3, 2, 1), "bnecks": []}
    mid = round(cout / 2)
    for _ in range(rep):
        c1 = make_conv(pb, cout, mid, 1, 1, 0)
        c2 = make_conv(pb, mid, cout, 3, 1, 1)
        blk["bnecks"].append((c1, c2))
    return blk


def apply_block(x, blk):
    x = apply_conv_block(x, blk["down"])
    for c1, c2 in blk["bnecks"]:
        x = apply_bottleneck(x, c1, c2)
    return x


def make_loop_block(pb, cin, cout, rep):
    convs = []
    for idx in range(1, rep + 1):
        if idx % 2 == 1:
            convs.append(make_conv(pb, cin, cout, 1, 1, 0))
        else:
            convs.append(make_conv(pb, cout, cin, 3, 1, 1))
    return convs


def apply_loop(x, convs):
    for p in convs:
        x = apply_conv_block(x, p)
    return x


def make_upsampling(pb, cin, cout, res_ch, rep):
    conv_in = make_conv(pb, cin, cout, 1, 1, 0)
    first = make_split_conv1x1(pb, cout, res_ch, cout)     # fused loop conv #1
    convs = []
    for idx in range(2, rep + 1):
        if idx % 2 == 1:
            convs.append(make_conv(pb, cin, cout, 1, 1, 0))
        else:
            convs.append(make_conv(pb, cout, cin, 3, 1, 1))
    return {"conv_in": conv_in, "first": first, "loop": convs}


def apply_upsampling(x, x_res, blk):
    """conv_in -> fused (nearest-x2 upsample + channel concat + first 1x1 conv)
    -> remaining loop convs.  Nearest upsampling commutes with a 1x1 conv, so the
    upsampled branch is computed at low resolution (z) and only the small z map is
    expanded; x_up / x_cat are never materialized in HBM.  (x_res is always given
    in Darknet.forward.)"""
    x_in = apply_conv_block(x, blk["conv_in"])
    n, h, w, c_up = x_in.shape
    first = blk["first"]
    np_ = first["np"]

    z = fused_conv_matmul(x_in.reshape(n * h * w, c_up), first["w_up"], mode="linear")
    z_up = upsample_nearest2(z.reshape(n, h, w, np_)).reshape(n * 4 * h * w, np_)

    nr, hr, wr, c_res = x_res.shape
    y = fused_conv_matmul(x_res.reshape(nr * hr * wr, c_res), first["w_res"],
                          first["bias"], extra=z_up, mode="preadd")
    cout = first["cout"]
    if np_ > cout:
        y = y[:, :cout]
    x_out = y.reshape(nr, hr, wr, cout)
    return apply_loop(x_out, blk["loop"])


def make_darknet(key, in_ch, filters=32):
    pb = ParamBuilder(key)
    f = filters
    return {
        "conv0": make_conv(pb, in_ch, f, 3, 1, 1),
        "conv1": make_block(pb, f, 2 * f, 1),
        "conv2": make_block(pb, 2 * f, 4 * f, 2),
        "conv3": make_block(pb, 4 * f, 8 * f, 8),
        "conv4": make_block(pb, 8 * f, 16 * f, 8),
        "conv5": make_block(pb, 16 * f, 32 * f, 4),
        "conv_low": make_loop_block(pb, 32 * f, 16 * f, 5),
        "conv_up1": make_upsampling(pb, 16 * f, 8 * f, 16 * f, 5),
        "conv_up2": make_upsampling(pb, 8 * f, 4 * f, 8 * f, 5),
    }


def darknet_forward(x, params):
    x0 = apply_conv_block(x, params["conv0"])
    x1 = apply_block(x0, params["conv1"])
    x2 = apply_block(x1, params["conv2"])
    x3 = apply_block(x2, params["conv3"])
    x4 = apply_block(x3, params["conv4"])
    x5 = apply_block(x4, params["conv5"])
    x_out1 = apply_loop(x5, params["conv_low"])
    x_out2 = apply_upsampling(x_out1, x4, params["conv_up1"])
    x_out3 = apply_upsampling(x_out2, x3, params["conv_up2"])
    return x_out1, x_out2, x_out3


# ----------------------------------------------------------------------------
if __name__ == "__main__":
    key = jax.random.PRNGKey(0)
    kx, kp = jax.random.split(key)

    B, C, H, W = 2, 3, 64, 64          # small shapes; H,W divisible by 32
    FILTERS = 8

    x_nchw = jax.random.normal(kx, (B, C, H, W), jnp.float32)     # PyTorch-style input
    x = jnp.transpose(x_nchw, (0, 2, 3, 1)).astype(jnp.bfloat16)  # NCHW -> NHWC bf16

    params = make_darknet(kp, C, filters=FILTERS)
    out1, out2, out3 = darknet_forward(x, params)
    jax.block_until_ready((out1, out2, out3))

    assert out1.shape == (B, H // 32, W // 32, 16 * FILTERS)
    assert out2.shape == (B, H // 16, W // 16, 8 * FILTERS)
    assert out3.shape == (B, H // 8, W // 8, 4 * FILTERS)
    print("KERNEL_OK")
</pallas_src>

<mosaic_0001>
module attributes {stable_mosaic.version = 11 : i64} {
  func.func @_mm_kernel(%arg0: i32, %arg1: i32, %arg2: i32, %arg3: memref<512x27xbf16, #tpu.memory_space<vmem>>, %arg4: memref<27x128xbf16, #tpu.memory_space<vmem>>, %arg5: memref<1x128xf32, #tpu.memory_space<vmem>>, %arg6: memref<512x128xbf16, #tpu.memory_space<vmem>>, %arg7: memref<512x128xf32, #tpu.memory_space<vmem>>) attributes {dimension_semantics = [#tpu.dimension_semantics<parallel>, #tpu.dimension_semantics<parallel>, #tpu.dimension_semantics<arbitrary>], iteration_bounds = array<i64: 16, 1, 1>, scalar_prefetch = 0 : i64, scratch_operands = 1 : i64, tpu.core_type = #tpu.core_type<tc>, window_params = [{transform_indices = @transform_0, window_bounds = array<i64: 512, 27>}, {transform_indices = @transform_1, window_bounds = array<i64: 27, 128>}, {transform_indices = @transform_2, window_bounds = array<i64: 1, 128>}, {transform_indices = @transform_3, window_bounds = array<i64: 512, 128>}]} {
    %c0_i32 = arith.constant 0 : i32
    %0 = arith.cmpi eq, %arg2, %c0_i32 : i32
    %1 = arith.extui %0 : i1 to i32
    %c0_i32_0 = arith.constant 0 : i32
    %2 = arith.cmpi ne, %1, %c0_i32_0 : i32
    scf.if %2 {
      %cst_10 = arith.constant 0.000000e+00 : f32
      %12 = vector.broadcast %cst_10 : f32 to vector<512x128xf32>
      %c0_11 = arith.constant 0 : index
      %c0_12 = arith.constant 0 : index
      %13 = vector.load %arg7[%c0_11, %c0_12] : memref<512x128xf32, #tpu.memory_space<vmem>>, vector<512x128xf32>
      tpu.vector_store %arg7[%c0_11, %c0_12], %12 {strides = array<i32>} : memref<512x128xf32, #tpu.memory_space<vmem>>, vector<512x128xf32>,
    } else {
    }
    %c0 = arith.constant 0 : index
    %c0_1 = arith.constant 0 : index
    %3 = vector.load %arg7[%c0, %c0_1] : memref<512x128xf32, #tpu.memory_space<vmem>>, vector<512x128xf32>
    %c0_2 = arith.constant 0 : index
    %c0_3 = arith.constant 0 : index
    %4 = vector.load %arg3[%c0_2, %c0_3] : memref<512x27xbf16, #tpu.memory_space<vmem>>, vector<512x27xbf16>
    %c0_4 = arith.constant 0 : index
    %c0_5 = arith.constant 0 : index
    %5 = vector.load %arg4[%c0_4, %c0_5] : memref<27x128xbf16, #tpu.memory_space<vmem>>, vector<27x128xbf16>
    %cst = arith.constant dense<0.000000e+00> : vector<512x128xf32>
    %6 = tpu.matmul %4, %5, %cst {dimension_numbers = #tpu.dot_dimension_numbers<[1], [0], [0], [1], [0, 0, 1, 1], [], []>} : vector<512x27xbf16>, vector<27x128xbf16>, vector<512x128xf32> -> vector<512x128xf32>
    %7 = arith.addf %3, %6 : vector<512x128xf32>
    %c0_6 = arith.constant 0 : index
    %c0_7 = arith.constant 0 : index
    %8 = vector.load %arg7[%c0_6, %c0_7] : memref<512x128xf32, #tpu.memory_space<vmem>>, vector<512x128xf32>
    tpu.vector_store %arg7[%c0_6, %c0_7], %7 {strides = array<i32>} : memref<512x128xf32, #tpu.memory_space<vmem>>, vector<512x128xf32>,
    %c0_i32_8 = arith.constant 0 : i32
    %9 = arith.cmpi eq, %arg2, %c0_i32_8 : i32
    %10 = arith.extui %9 : i1 to i32
    %c0_i32_9 = arith.constant 0 : i32
    %11 = arith.cmpi ne, %10, %c0_i32_9 : i32
    scf.if %11 {
      %c0_10 = arith.constant 0 : index
      %c0_11 = arith.constant 0 : index
      %12 = vector.load %arg7[%c0_10, %c0_11] : memref<512x128xf32, #tpu.memory_space<vmem>>, vector<512x128xf32>
      %c0_12 = arith.constant 0 : index
      %c0_13 = arith.constant 0 : index
      %13 = vector.load %arg5[%c0_12, %c0_13] : memref<1x128xf32, #tpu.memory_space<vmem>>, vector<1x128xf32>
      %14 = vector.broadcast %13 : vector<1x128xf32> to vector<512x128xf32>
      %15 = arith.addf %12, %14 : vector<512x128xf32>
      %cst_14 = arith.constant 0.00999999977 : f32
      %16 = vector.broadcast %cst_14 : f32 to vector<512x128xf32>
      %17 = arith.mulf %16, %15 : vector<512x128xf32>
      %18 = arith.maximumf %15, %17 : vector<512x128xf32>
      %19 = arith.truncf %18 : vector<512x128xf32> to vector<512x128xbf16>
      %c0_15 = arith.constant 0 : index
      %c0_16 = arith.constant 0 : index
      %20 = vector.load %arg6[%c0_15, %c0_16] : memref<512x128xbf16, #tpu.memory_space<vmem>>, vector<512x128xbf16>
      tpu.vector_store %arg6[%c0_15, %c0_16], %19 {strides = array<i32>} : memref<512x128xbf16, #tpu.memory_space<vmem>>, vector<512x128xbf16>,
    } else {
    }
    return
  }
  func.func @transform_0(%arg0: i32, %arg1: i32, %arg2: i32) -> (i32, i32) {
    %c0_i32 = arith.constant 0 : i32
    return %arg0, %arg2 : i32, i32
  }
  func.func @transform_1(%arg0: i32, %arg1: i32, %arg2: i32) -> (i32, i32) {
    %c0_i32 = arith.constant 0 : i32
    return %arg2, %arg1 : i32, i32
  }
  func.func @transform_2(%arg0: i32, %arg1: i32, %arg2: i32) -> (i32, i32) {
    %c0_i32 = arith.constant 0 : i32
    %c0_i32_0 = arith.constant 0 : i32
    return %c0_i32, %arg1 : i32, i32
  }
  func.func @transform_3(%arg0: i32, %arg1: i32, %arg2: i32) -> (i32, i32) {
    %c0_i32 = arith.constant 0 : i32
    return %arg0, %arg1 : i32, i32
  }
}

</mosaic_0001>

<llo_original>
// kernel: tpu_custom_call.1
$region0: #{tpu_custom_call.1}
  #allocation0 [shape = 'u32[]', space=smem, size = 0x4, offset = 0x4, fixed_abs, tag = 'smem constant byte address 0x4 - core index']
  #allocation1 [shape = 'u32[144,128]{1,0:T(1,128)}', space=vmem, size = 0x12000, scoped, tag = 'internal scratch']
  #allocation2 [shape = 'f32[512,128]{1,0:T(8,128)}', space=vmem, size = 0x40000, scoped, tag = 'scratch operand']
  %s0 = inlined_call_operand.vmem [shape: bf16[8192,27], index: 0, kind: input, shape index: {}]
  %s1 = inlined_call_operand.vmem [shape: bf16[27,128], index: 1, kind: input, shape index: {}]
  %s2 = inlined_call_operand.vmem [shape: f32[1,128], index: 2, kind: input, shape index: {}]
  %s3 = inlined_call_operand.hbm [shape: bf16[8192,128], index: 3, kind: output, shape index: {}]
  %s4 = sld [smem:[#allocation0]]
  $region53: #{tpu_custom_call.1} parent=0
    _
  %s6 = ssub.s32 1, %s4
  %s7 = scalar_select 0, %s6, %s4
  $region1: #{tpu_custom_call.1} parent=0
    #allocation3 [shape = 'u8[262144]{0}', space=vmem, size = 0x40000, scoped, tag = 'output window, operand 0']
    #allocation4 [shape = 's32[2]{0}', space=sflag, size = 0x8, scoped, tag = 'scoped memory for tpu_custom_call.1']
    %8 = vsyncpa [#allocation4], 0
    %s9 = scalar_lea.sflag [#allocation4], 1
    %10 = vsyncpa %s9, 0
    loop: start=0, step=1, limit=18
    $region2: #{tpu_custom_call.1} parent=1 // loop_pre_header
      _
    $region3: #{tpu_custom_call.1} parent=1 // loop_header
      %s12 = sphi 0, %s16
      %p13 = scmp.ge.s32.totalorder %s12, 18
      %s19 = sphi 0, %s38
      %s20 = sphi 0, %s34
      %s21 = sphi 0, %s30
      %s22 = sphi 0, %s19
      %s23 = sphi 0, %s20
      %s24 = sphi 0, %s21
      %s25 = sphi 0, %s22
      %s26 = sphi 0, %s23
      %s27 = sphi 0, %s24
      %s43 = sphi 0, %s45
      %s46 = sphi 0, %s43
      %s47 = sphi 0, %s46
      %s63 = sphi 0, %s47
      %s71 = sphi 0, %s73
      %s74 = sphi 0, %s71
      %s75 = sphi 0, %s74
      %s91 = sphi 0, %s75
      %s97 = sphi 0, %s99
      %s100 = sphi 0, %s97
      %s101 = sphi 0, %s100
      %s117 = sphi 0, %s101
      %s125 = sphi 0, %s127
      %s128 = sphi 0, %s125
      %s129 = sphi 0, %s128
      %s145 = sphi 0, %s129
    $region4: #{tpu_custom_call.1} parent=1 // loop_header_branch
      %15 = sbr.rel (%p13) target = $region8
    $region5: #{tpu_custom_call.1} parent=1 // loop_body
      %s17 = ssub.s32 %s12, 1
      %s18 = ssub.s32 %s12, 2
      %s28 = sadd.s32 1, %s21
      %p29 = scmp.ge.s32.totalorder %s28, 1
      %s30 = scalar_select %p29, 0, %s28
      %s31 = sadd.s32 1, %s20
      %s32 = scalar_select %p29, %s31, %s20
      %p33 = scmp.ge.s32.totalorder %s32, 1
      %s34 = scalar_select %p33, 0, %s32
      %s35 = sadd.s32 1, %s19
      %s36 = scalar_select %p33, %s35, %s19
      %p37 = scmp.ge.s32.totalorder %s36, 16
      %s38 = scalar_select %p37, 0, %s36
      %s39 = ssub.s32 %s19, %s38
      %s40 = ssub.s32 %s21, %s30
      %s41 = sor.u32 %s39, %s40
      %p42 = scmp.eq.s32.totalorder %s41, 0
      %s44 = sadd.s32 %s43, 1
      %s45 = scalar_select %p42, %s43, %s44
      %p48 = pneg %p42
      %p49 = scmp.eq.s32.totalorder %s12, 15
      %p50 = por %p48, %p49
      %p51 = scmp.ne.s32.totalorder %s43, %s46
      %p52 = scmp.eq.s32.totalorder %s12, 0
      %p53 = por %p51, %p52
      %p54 = scmp.ne.s32.totalorder %s43, %s46
      %p55 = scmp.eq.s32.totalorder %s17, 15
      %p56 = por %p54, %p55
      %p57 = scmp.ne.s32.totalorder %s46, %s47
      %p58 = scmp.eq.s32.totalorder %s17, 0
      %p59 = por %p57, %p58
      %p60 = scmp.ne.s32.totalorder %s46, %s47
      %p61 = scmp.eq.s32.totalorder %s18, 15
      %p62 = por %p60, %p61
      %p64 = scmp.ne.s32.totalorder %s47, %s63
      %p65 = scmp.eq.s32.totalorder %s18, 0
      %p66 = por %p64, %p65
      %s67 = ssub.s32 %s21, %s30
      %s68 = ssub.s32 %s20, %s34
      %s69 = sor.u32 %s67, %s68
      %p70 = scmp.eq.s32.totalorder %s69, 0
      %s72 = sadd.s32 %s71, 1
      %s73 = scalar_select %p70, %s71, %s72
      %p76 = pneg %p70
      %p77 = scmp.eq.s32.totalorder %s12, 15
      %p78 = por %p76, %p77
      %p79 = scmp.ne.s32.totalorder %s71, %s74
      %p80 = scmp.eq.s32.totalorder %s12, 0
      %p81 = por %p79, %p80
      %p82 = scmp.ne.s32.totalorder %s71, %s74
      %p83 = scmp.eq.s32.totalorder %s17, 15
      %p84 = por %p82, %p83
      %p85 = scmp.ne.s32.totalorder %s74, %s75
      %p86 = scmp.eq.s32.totalorder %s17, 0
      %p87 = por %p85, %p86
      %p88 = scmp.ne.s32.totalorder %s74, %s75
      %p89 = scmp.eq.s32.totalorder %s18, 15
      %p90 = por %p88, %p89
      %p92 = scmp.ne.s32.totalorder %s75, %s91
      %p93 = scmp.eq.s32.totalorder %s18, 0
      %p94 = por %p92, %p93
      %s95 = ssub.s32 %s20, %s34
      %p96 = scmp.eq.s32.totalorder %s95, 0
      %s98 = sadd.s32 %s97, 1
      %s99 = scalar_select %p96, %s97, %s98
      %p102 = pneg %p96
      %p103 = scmp.eq.s32.totalorder %s12, 15
      %p104 = por %p102, %p103
      %p105 = scmp.ne.s32.totalorder %s97, %s100
      %p106 = scmp.eq.s32.totalorder %s12, 0
      %p107 = por %p105, %p106
      %p108 = scmp.ne.s32.totalorder %s97, %s100
      %p109 = scmp.eq.s32.totalorder %s17, 15
      %p110 = por %p108, %p109
      %p111 = scmp.ne.s32.totalorder %s100, %s101
      %p112 = scmp.eq.s32.totalorder %s17, 0
      %p113 = por %p111, %p112
      %p114 = scmp.ne.s32.totalorder %s100, %s101
      %p115 = scmp.eq.s32.totalorder %s18, 15
      %p116 = por %p114, %p115
      %p118 = scmp.ne.s32.totalorder %s101, %s117
      %p119 = scmp.eq.s32.totalorder %s18, 0
      %p120 = por %p118, %p119
      %s121 = ssub.s32 %s19, %s38
      %s122 = ssub.s32 %s20, %s34
      %s123 = sor.u32 %s121, %s122
      %p124 = scmp.eq.s32.totalorder %s123, 0
      %s126 = sadd.s32 %s125, 1
      %s127 = scalar_select %p124, %s125, %s126
      %p130 = pneg %p124
      %p131 = scmp.eq.s32.totalorder %s12, 15
      %p132 = por %p130, %p131
      %p133 = scmp.ne.s32.totalorder %s125, %s128
      %p134 = scmp.eq.s32.totalorder %s12, 0
      %p135 = por %p133, %p134
      %p136 = scmp.ne.s32.totalorder %s125, %s128
      %p137 = scmp.eq.s32.totalorder %s17, 15
      %p138 = por %p136, %p137
      %p139 = scmp.ne.s32.totalorder %s128, %s129
      %p140 = scmp.eq.s32.totalorder %s17, 0
      %p141 = por %p139, %p140
      %p142 = scmp.ne.s32.totalorder %s128, %s129
      %p143 = scmp.eq.s32.totalorder %s18, 15
      %p144 = por %p142, %p143
      %p146 = scmp.ne.s32.totalorder %s129, %s145
      %p147 = scmp.eq.s32.totalorder %s18, 0
      %p148 = por %p146, %p147
      %p149 = scmp.le.s32.totalorder 1, %s12
      %p150 = scmp.lt.s32.totalorder %s12, 17
      %p151 = pnand %p149, %p150
      %p152 = pneg %p151
      // Predicated region
      $region9: #{tpu_custom_call.1} parent=5 // pred_check
        _
      $region10: #{tpu_custom_call.1} parent=5 // pred_check_branch
        %154 = sbr.rel (%p151) target = $region12
      $region11: #{tpu_custom_call.1} parent=5 // pred_region
        %s155 = ssub.s32 %s12, 1
        // Predicated region
        $region13: #{tpu_custom_call.1} parent=11 // pred_check
          %p156 = pneg %p87
        $region14: #{tpu_custom_call.1} parent=11 // pred_check_branch
          %158 = sbr.rel (%p156) target = $region16
        $region15: #{tpu_custom_call.1} parent=11 // pred_region
          %s159 = smul.u32 4, %s24
          %p160 = scmp.lt.s32.totalorder %s159, 3
          %s161 = scalar_select %p160, %s159, 3
          %p162 = scmp.lt.s32.totalorder %s23, 0
          %s163 = scalar_select %p162, %s23, 0
          %s164 = sadd.s32 %s163, %s161
          %s165 = smul.addr %s164, 4
          %s166 = scalar_lea.vmem %s1, %s165
          %s167 = smul.u32 4, %s24
        $region16: #{tpu_custom_call.1} parent=11 // pred_fallthru
          _
        // Predicated region
        $region17: #{tpu_custom_call.1} parent=11 // pred_check
          %p168 = pneg %p113
        $region18: #{tpu_custom_call.1} parent=11 // pred_check_branch
          %170 = sbr.rel (%p168) target = $region20
        $region19: #{tpu_custom_call.1} parent=11 // pred_region
          %p171 = scmp.lt.s32.totalorder %s23, 0
          %s172 = scalar_select %p171, %s23, 0
          %s173 = scalar_lea.vmem %s2, %s172
        $region20: #{tpu_custom_call.1} parent=11 // pred_fallthru
          _
      $region12: #{tpu_custom_call.1} parent=5 // pred_fallthru
        _
      %p174 = scmp.lt.s32.totalorder %s12, 16
      // Predicated region
      $region21: #{tpu_custom_call.1} parent=5 // pred_check
        %p175 = pneg %p174
      $region22: #{tpu_custom_call.1} parent=5 // pred_check_branch
        %177 = sbr.rel (%p175) target = $region24
      $region23: #{tpu_custom_call.1} parent=5 // pred_region
        // Predicated region
        $region25: #{tpu_custom_call.1} parent=23 // pred_check
          %p178 = pneg %p53
        $region26: #{tpu_custom_call.1} parent=23 // pred_check_branch
          %180 = sbr.rel (%p178) target = $region28
        $region27: #{tpu_custom_call.1} parent=23 // pred_region
          %s181 = smul.u32 64, %s19
          %p182 = scmp.lt.s32.totalorder %s181, 1023
          %s183 = scalar_select %p182, %s181, 1023
          %p184 = scmp.lt.s32.totalorder %s21, 0
          %s185 = scalar_select %p184, %s21, 0
          %s186 = sadd.s32 %s185, %s183
          %s187 = smul.addr %s186, 4
          %s188 = scalar_lea.vmem %s0, %s187
          %s189 = smul.u32 64, %s19
        $region28: #{tpu_custom_call.1} parent=23 // pred_fallthru
          _
      $region24: #{tpu_custom_call.1} parent=5 // pred_fallthru
        _
      %p190 = scmp.le.s32.totalorder 1, %s12
      %p191 = scmp.lt.s32.totalorder %s12, 17
      %p192 = pnand %p190, %p191
      %p193 = pneg %p192
      // Predicated region
      $region29: #{tpu_custom_call.1} parent=5 // pred_check
        _
      $region30: #{tpu_custom_call.1} parent=5 // pred_check_branch
        %195 = sbr.rel (%p192) target = $region32
      $region31: #{tpu_custom_call.1} parent=5 // pred_region
        %s196 = ssub.s32 %s12, 1
        %s197 = smul.u32 64, %s22
        %p198 = scmp.lt.s32.totalorder %s197, 1023
        %s199 = scalar_select %p198, %s197, 1023
        %p200 = scmp.lt.s32.totalorder %s24, 0
        %s201 = scalar_select %p200, %s24, 0
        %s202 = sadd.s32 %s201, %s199
        %s203 = smul.addr %s202, 4
        %s204 = scalar_lea.vmem %s0, %s203
        %p205 = pneg %p59
        %p206 = pneg %p56
        %s207 = smul.u32 4, %s24
        %p208 = scmp.lt.s32.totalorder %s207, 3
        %s209 = scalar_select %p208, %s207, 3
        %p210 = scmp.lt.s32.totalorder %s23, 0
        %s211 = scalar_select %p210, %s23, 0
        %s212 = sadd.s32 %s211, %s209
        %s213 = smul.addr %s212, 4
        %s214 = scalar_lea.vmem %s1, %s213
        %p215 = pneg %p87
        %p216 = pneg %p84
        %p217 = scmp.lt.s32.totalorder %s23, 0
        %s218 = scalar_select %p217, %s23, 0
        %s219 = scalar_lea.vmem %s2, %s218
        %p220 = pneg %p113
        %p221 = pneg %p110
        %p222 = pneg %p141
        %p223 = pneg %p138
        %s224 = sand.u32 %s128, 1
        %s225 = scalar_lea.sflag [#allocation4], %s224
        %s226 = sand.u32 %s128, 1
        %s227 = smul.addr %s226, 256
        %s228 = scalar_lea.vmem [#allocation3], %s227
        %s229 = smul.u32 64, %s22
        %p230 = scmp.lt.s32.totalorder %s229, 1023
        %s231 = scalar_select %p230, %s229, 1023
        %p232 = scmp.lt.s32.totalorder %s24, 0
        %s233 = scalar_select %p232, %s24, 0
        %s234 = sadd.s32 %s233, %s231
        %s235 = smul.addr %s234, 4
        %s236 = scalar_lea.vmem %s0, %s235
        %s237 = smul.u32 64, %s22
        %s238 = smul.u32 4, %s24
        %p239 = scmp.lt.s32.totalorder %s238, 3
        %s240 = scalar_select %p239, %s238, 3
        %p241 = scmp.lt.s32.totalorder %s23, 0
        %s242 = scalar_select %p241, %s23, 0
        %s243 = sadd.s32 %s242, %s240
        %s244 = smul.addr %s243, 4
        %s245 = scalar_lea.vmem %s1, %s244
        %s246 = smul.u32 4, %s24
        %p247 = scmp.lt.s32.totalorder %s23, 0
        %s248 = scalar_select %p247, %s23, 0
        %s249 = scalar_lea.vmem %s2, %s248
        %s250 = smul.u32 64, %s22
        %p252 = scmp.eq.s32.totalorder %s24, 0
        // Predicated region
        $region33: #{tpu_custom_call.1} parent=31 // pred_check
          %p253 = pneg %p252
        $region34: #{tpu_custom_call.1} parent=31 // pred_check_branch
          %255 = sbr.rel (%p253) target = $region36
        $region35: #{tpu_custom_call.1} parent=31 // pred_region
          %256 = vst [vmem:[#allocation2] sm:$0xff] 0.0
          %257 = vst [vmem:[#allocation2 + $0x8] sm:$0xff] 0.0
          %258 = vst [vmem:[#allocation2 + $0x10] sm:$0xff] 0.0
          %259 = vst [vmem:[#allocation2 + $0x18] sm:$0xff] 0.0
          %260 = vst [vmem:[#allocation2 + $0x20] sm:$0xff] 0.0
          %261 = vst [vmem:[#allocation2 + $0x28] sm:$0xff] 0.0
          %262 = vst [vmem:[#allocation2 + $0x30] sm:$0xff] 0.0
          %263 = vst [vmem:[#allocation2 + $0x38] sm:$0xff] 0.0
          %264 = vst [vmem:[#allocation2 + $0x40] sm:$0xff] 0.0
          %265 = vst [vmem:[#allocation2 + $0x48] sm:$0xff] 0.0
          %266 = vst [vmem:[#allocation2 + $0x50] sm:$0xff] 0.0
          %267 = vst [vmem:[#allocation2 + $0x58] sm:$0xff] 0.0
          %268 = vst [vmem:[#allocation2 + $0x60] sm:$0xff] 0.0
          %269 = vst [vmem:[#allocation2 + $0x68] sm:$0xff] 0.0
          %270 = vst [vmem:[#allocation2 + $0x70] sm:$0xff] 0.0
          %271 = vst [vmem:[#allocation2 + $0x78] sm:$0xff] 0.0
          %272 = vst [vmem:[#allocation2 + $0x80] sm:$0xff] 0.0
          %273 = vst [vmem:[#allocation2 + $0x88] sm:$0xff] 0.0
          %274 = vst [vmem:[#allocation2 + $0x90] sm:$0xff] 0.0
          %275 = vst [vmem:[#allocation2 + $0x98] sm:$0xff] 0.0
          %276 = vst [vmem:[#allocation2 + $0xa0] sm:$0xff] 0.0
          %277 = vst [vmem:[#allocation2 + $0xa8] sm:$0xff] 0.0
          %278 = vst [vmem:[#allocation2 + $0xb0] sm:$0xff] 0.0
          %279 = vst [vmem:[#allocation2 + $0xb8] sm:$0xff] 0.0
          %280 = vst [vmem:[#allocation2 + $0xc0] sm:$0xff] 0.0
          %281 = vst [vmem:[#allocation2 + $0xc8] sm:$0xff] 0.0
          %282 = vst [vmem:[#allocation2 + $0xd0] sm:$0xff] 0.0
          %283 = vst [vmem:[#allocation2 + $0xd8] sm:$0xff] 0.0
          %284 = vst [vmem:[#allocation2 + $0xe0] sm:$0xff] 0.0
          %285 = vst [vmem:[#allocation2 + $0xe8] sm:$0xff] 0.0
          %286 = vst [vmem:[#allocation2 + $0xf0] sm:$0xff] 0.0
          %287 = vst [vmem:[#allocation2 + $0xf8] sm:$0xff] 0.0
          %288 = vst [vmem:[#allocation2 + $0x100] sm:$0xff] 0.0
          %289 = vst [vmem:[#allocation2 + $0x108] sm:$0xff] 0.0
          %290 = vst [vmem:[#allocation2 + $0x110] sm:$0xff] 0.0
          %291 = vst [vmem:[#allocation2 + $0x118] sm:$0xff] 0.0
          %292 = vst [vmem:[#allocation2 + $0x120] sm:$0xff] 0.0
          %293 = vst [vmem:[#allocation2 + $0x128] sm:$0xff] 0.0
          %294 = vst [vmem:[#allocation2 + $0x130] sm:$0xff] 0.0
          %295 = vst [vmem:[#allocation2 + $0x138] sm:$0xff] 0.0
          %296 = vst [vmem:[#allocation2 + $0x140] sm:$0xff] 0.0
          %297 = vst [vmem:[#allocation2 + $0x148] sm:$0xff] 0.0
          %298 = vst [vmem:[#allocation2 + $0x150] sm:$0xff] 0.0
          %299 = vst [vmem:[#allocation2 + $0x158] sm:$0xff] 0.0
          %300 = vst [vmem:[#allocation2 + $0x160] sm:$0xff] 0.0
          %301 = vst [vmem:[#allocation2 + $0x168] sm:$0xff] 0.0
          %302 = vst [vmem:[#allocation2 + $0x170] sm:$0xff] 0.0
          %303 = vst [vmem:[#allocation2 + $0x178] sm:$0xff] 0.0
          %304 = vst [vmem:[#allocation2 + $0x180] sm:$0xff] 0.0
          %305 = vst [vmem:[#allocation2 + $0x188] sm:$0xff] 0.0
          %306 = vst [vmem:[#allocation2 + $0x190] sm:$0xff] 0.0
          %307 = vst [vmem:[#allocation2 + $0x198] sm:$0xff] 0.0
          %308 = vst [vmem:[#allocation2 + $0x1a0] sm:$0xff] 0.0
          %309 = vst [vmem:[#allocation2 + $0x1a8] sm:$0xff] 0.0
          %310 = vst [vmem:[#allocation2 + $0x1b0] sm:$0xff] 0.0
          %311 = vst [vmem:[#allocation2 + $0x1b8] sm:$0xff] 0.0
          %312 = vst [vmem:[#allocation2 + $0x1c0] sm:$0xff] 0.0
          %313 = vst [vmem:[#allocation2 + $0x1c8] sm:$0xff] 0.0
          %314 = vst [vmem:[#allocation2 + $0x1d0] sm:$0xff] 0.0
          %315 = vst [vmem:[#allocation2 + $0x1d8] sm:$0xff] 0.0
          %316 = vst [vmem:[#allocation2 + $0x1e0] sm:$0xff] 0.0
          %317 = vst [vmem:[#allocation2 + $0x1e8] sm:$0xff] 0.0
          %318 = vst [vmem:[#allocation2 + $0x1f0] sm:$0xff] 0.0
          %319 = vst [vmem:[#allocation2 + $0x1f8] sm:$0xff] 0.0
        $region36: #{tpu_custom_call.1} parent=31 // pred_fallthru
          _
        %v320 = vld [vmem:[#allocation2] sm:$0xff]
        %v321 = vld [vmem:[#allocation2 + $0x8] sm:$0xff]
        %v322 = vld [vmem:[#allocation2 + $0x10] sm:$0xff]
        %v323 = vld [vmem:[#allocation2 + $0x18] sm:$0xff]
        %v324 = vld [vmem:[#allocation2 + $0x20] sm:$0xff]
        %v325 = vld [vmem:[#allocation2 + $0x28] sm:$0xff]
        %v326 = vld [vmem:[#allocation2 + $0x30] sm:$0xff]
        %v327 = vld [vmem:[#allocation2 + $0x38] sm:$0xff]
        %v328 = vld [vmem:[#allocation2 + $0x40] sm:$0xff]
        %v329 = vld [vmem:[#allocation2 + $0x48] sm:$0xff]
        %v330 = vld [vmem:[#allocation2 + $0x50] sm:$0xff]
        %v331 = vld [vmem:[#allocation2 + $0x58] sm:$0xff]
        %v332 = vld [vmem:[#allocation2 + $0x60] sm:$0xff]
        %v333 = vld [vmem:[#allocation2 + $0x68] sm:$0xff]
        %v334 = vld [vmem:[#allocation2 + $0x70] sm:$0xff]
        %v335 = vld [vmem:[#allocation2 + $0x78] sm:$0xff]
        %v336 = vld [vmem:[#allocation2 + $0x80] sm:$0xff]
        %v337 = vld [vmem:[#allocation2 + $0x88] sm:$0xff]
        %v338 = vld [vmem:[#allocation2 + $0x90] sm:$0xff]
        %v339 = vld [vmem:[#allocation2 + $0x98] sm:$0xff]
        %v340 = vld [vmem:[#allocation2 + $0xa0] sm:$0xff]
        %v341 = vld [vmem:[#allocation2 + $0xa8] sm:$0xff]
        %v342 = vld [vmem:[#allocation2 + $0xb0] sm:$0xff]
        %v343 = vld [vmem:[#allocation2 + $0xb8] sm:$0xff]
        %v344 = vld [vmem:[#allocation2 + $0xc0] sm:$0xff]
        %v345 = vld [vmem:[#allocation2 + $0xc8] sm:$0xff]
        %v346 = vld [vmem:[#allocation2 + $0xd0] sm:$0xff]
        %v347 = vld [vmem:[#allocation2 + $0xd8] sm:$0xff]
        %v348 = vld [vmem:[#allocation2 + $0xe0] sm:$0xff]
        %v349 = vld [vmem:[#allocation2 + $0xe8] sm:$0xff]
        %v350 = vld [vmem:[#allocation2 + $0xf0] sm:$0xff]
        %v351 = vld [vmem:[#allocation2 + $0xf8] sm:$0xff]
        %v352 = vld [vmem:[#allocation2 + $0x100] sm:$0xff]
        %v353 = vld [vmem:[#allocation2 + $0x108] sm:$0xff]
        %v354 = vld [vmem:[#allocation2 + $0x110] sm:$0xff]
        %v355 = vld [vmem:[#allocation2 + $0x118] sm:$0xff]
        %v356 = vld [vmem:[#allocation2 + $0x120] sm:$0xff]
        %v357 = vld [vmem:[#allocation2 + $0x128] sm:$0xff]
        %v358 = vld [vmem:[#allocation2 + $0x130] sm:$0xff]
        %v359 = vld [vmem:[#allocation2 + $0x138] sm:$0xff]
        %v360 = vld [vmem:[#allocation2 + $0x140] sm:$0xff]
        %v361 = vld [vmem:[#allocation2 + $0x148] sm:$0xff]
        %v362 = vld [vmem:[#allocation2 + $0x150] sm:$0xff]
        %v363 = vld [vmem:[#allocation2 + $0x158] sm:$0xff]
        %v364 = vld [vmem:[#allocation2 + $0x160] sm:$0xff]
        %v365 = vld [vmem:[#allocation2 + $0x168] sm:$0xff]
        %v366 = vld [vmem:[#allocation2 + $0x170] sm:$0xff]
        %v367 = vld [vmem:[#allocation2 + $0x178] sm:$0xff]
        %v368 = vld [vmem:[#allocation2 + $0x180] sm:$0xff]
        %v369 = vld [vmem:[#allocation2 + $0x188] sm:$0xff]
        %v370 = vld [vmem:[#allocation2 + $0x190] sm:$0xff]
        %v371 = vld [vmem:[#allocation2 + $0x198] sm:$0xff]
        %v372 = vld [vmem:[#allocation2 + $0x1a0] sm:$0xff]
        %v373 = vld [vmem:[#allocation2 + $0x1a8] sm:$0xff]
        %v374 = vld [vmem:[#allocation2 + $0x1b0] sm:$0xff]
        %v375 = vld [vmem:[#allocation2 + $0x1b8] sm:$0xff]
        %v376 = vld [vmem:[#allocation2 + $0x1c0] sm:$0xff]
        %v377 = vld [vmem:[#allocation2 + $0x1c8] sm:$0xff]
        %v378 = vld [vmem:[#allocation2 + $0x1d0] sm:$0xff]
        %v379 = vld [vmem:[#allocation2 + $0x1d8] sm:$0xff]
        %v380 = vld [vmem:[#allocation2 + $0x1e0] sm:$0xff]
        %v381 = vld [vmem:[#allocation2 + $0x1e8] sm:$0xff]
        %v382 = vld [vmem:[#allocation2 + $0x1f0] sm:$0xff]
        %v383 = vld [vmem:[#allocation2 + $0x1f8] sm:$0xff]
        %v384 = vld [vmem:[%s236] sm:$0xf]
        %v385 = vld [vmem:[%s236 + $0x4] sm:$0xf]
        %v386 = vld [vmem:[%s236 + $0x8] sm:$0xf]
        %v387 = vld [vmem:[%s236 + $0xc] sm:$0xf]
        %v388 = vld [vmem:[%s236 + $0x10] sm:$0xf]
        %v389 = vld [vmem:[%s236 + $0x14] sm:$0xf]
        %v390 = vld [vmem:[%s236 + $0x18] sm:$0xf]
        %v391 = vld [vmem:[%s236 + $0x1c] sm:$0xf]
        %v392 = vld [vmem:[%s236 + $0x20] sm:$0xf]
        %v393 = vld [vmem:[%s236 + $0x24] sm:$0xf]
        %v394 = vld [vmem:[%s236 + $0x28] sm:$0xf]
        %v395 = vld [vmem:[%s236 + $0x2c] sm:$0xf]
        %v396 = vld [vmem:[%s236 + $0x30] sm:$0xf]
        %v397 = vld [vmem:[%s236 + $0x34] sm:$0xf]
        %v398 = vld [vmem:[%s236 + $0x38] sm:$0xf]
        %v399 = vld [vmem:[%s236 + $0x3c] sm:$0xf]
        %v400 = vld [vmem:[%s236 + $0x40] sm:$0xf]
        %v401 = vld [vmem:[%s236 + $0x44] sm:$0xf]
        %v402 = vld [vmem:[%s236 + $0x48] sm:$0xf]
        %v403 = vld [vmem:[%s236 + $0x4c] sm:$0xf]
        %v404 = vld [vmem:[%s236 + $0x50] sm:$0xf]
        %v405 = vld [vmem:[%s236 + $0x54] sm:$0xf]
        %v406 = vld [vmem:[%s236 + $0x58] sm:$0xf]
        %v407 = vld [vmem:[%s236 + $0x5c] sm:$0xf]
        %v408 = vld [vmem:[%s236 + $0x60] sm:$0xf]
        %v409 = vld [vmem:[%s236 + $0x64] sm:$0xf]
        %v410 = vld [vmem:[%s236 + $0x68] sm:$0xf]
        %v411 = vld [vmem:[%s236 + $0x6c] sm:$0xf]
        %v412 = vld [vmem:[%s236 + $0x70] sm:$0xf]
        %v413 = vld [vmem:[%s236 + $0x74] sm:$0xf]
        %v414 = vld [vmem:[%s236 + $0x78] sm:$0xf]
        %v415 = vld [vmem:[%s236 + $0x7c] sm:$0xf]
        %v416 = vld [vmem:[%s236 + $0x80] sm:$0xf]
        %v417 = vld [vmem:[%s236 + $0x84] sm:$0xf]
        %v418 = vld [vmem:[%s236 + $0x88] sm:$0xf]
        %v419 = vld [vmem:[%s236 + $0x8c] sm:$0xf]
        %v420 = vld [vmem:[%s236 + $0x90] sm:$0xf]
        %v421 = vld [vmem:[%s236 + $0x94] sm:$0xf]
        %v422 = vld [vmem:[%s236 + $0x98] sm:$0xf]
        %v423 = vld [vmem:[%s236 + $0x9c] sm:$0xf]
        %v424 = vld [vmem:[%s236 + $0xa0] sm:$0xf]
        %v425 = vld [vmem:[%s236 + $0xa4] sm:$0xf]
        %v426 = vld [vmem:[%s236 + $0xa8] sm:$0xf]
        %v427 = vld [vmem:[%s236 + $0xac] sm:$0xf]
        %v428 = vld [vmem:[%s236 + $0xb0] sm:$0xf]
        %v429 = vld [vmem:[%s236 + $0xb4] sm:$0xf]
        %v430 = vld [vmem:[%s236 + $0xb8] sm:$0xf]
        %v431 = vld [vmem:[%s236 + $0xbc] sm:$0xf]
        %v432 = vld [vmem:[%s236 + $0xc0] sm:$0xf]
        %v433 = vld [vmem:[%s236 + $0xc4] sm:$0xf]
        %v434 = vld [vmem:[%s236 + $0xc8] sm:$0xf]
        %v435 = vld [vmem:[%s236 + $0xcc] sm:$0xf]
        %v436 = vld [vmem:[%s236 + $0xd0] sm:$0xf]
        %v437 = vld [vmem:[%s236 + $0xd4] sm:$0xf]
        %v438 = vld [vmem:[%s236 + $0xd8] sm:$0xf]
        %v439 = vld [vmem:[%s236 + $0xdc] sm:$0xf]
        %v440 = vld [vmem:[%s236 + $0xe0] sm:$0xf]
        %v441 = vld [vmem:[%s236 + $0xe4] sm:$0xf]
        %v442 = vld [vmem:[%s236 + $0xe8] sm:$0xf]
        %v443 = vld [vmem:[%s236 + $0xec] sm:$0xf]
        %v444 = vld [vmem:[%s236 + $0xf0] sm:$0xf]
        %v445 = vld [vmem:[%s236 + $0xf4] sm:$0xf]
        %v446 = vld [vmem:[%s236 + $0xf8] sm:$0xf]
        %v447 = vld [vmem:[%s236 + $0xfc] sm:$0xf]
        %v448 = vld [vmem:[%s245] sm:$0xf]
        %v449 = vld [vmem:[%s245 + $0x4] sm:$0xf]
        %v450 = vld [vmem:[%s245 + $0x8] sm:$0xf]
        %v451 = vld [vmem:[%s245 + $0xc] sm:$0x3]
        %v516 = vunpack.c.l.b16 %v384
        %v517 = vunpack.c.l.b16 %v385
        %v518 = vunpack.c.l.b16 %v386
        %v519 = vunpack.c.l.b16 %v387
        %v520 = vunpack.c.l.b16 %v388
        %v521 = vunpack.c.l.b16 %v389
        %v522 = vunpack.c.l.b16 %v390
        %v523 = vunpack.c.l.b16 %v391
        %v524 = vunpack.c.l.b16 %v392
        %v525 = vunpack.c.l.b16 %v393
        %v526 = vunpack.c.l.b16 %v394
        %v527 = vunpack.c.l.b16 %v395
        %v528 = vunpack.c.l.b16 %v396
        %v529 = vunpack.c.l.b16 %v397
        %v530 = vunpack.c.l.b16 %v398
        %v531 = vunpack.c.l.b16 %v399
        %v532 = vunpack.c.l.b16 %v400
        %v533 = vunpack.c.l.b16 %v401
        %v534 = vunpack.c.l.b16 %v402
        %v535 = vunpack.c.l.b16 %v403
        %v536 = vunpack.c.l.b16 %v404
        %v537 = vunpack.c.l.b16 %v405
        %v538 = vunpack.c.l.b16 %v406
        %v539 = vunpack.c.l.b16 %v407
        %v540 = vunpack.c.l.b16 %v408
        %v541 = vunpack.c.l.b16 %v409
        %v542 = vunpack.c.l.b16 %v410
        %v543 = vunpack.c.l.b16 %v411
        %v544 = vunpack.c.l.b16 %v412
        %v545 = vunpack.c.l.b16 %v413
        %v546 = vunpack.c.l.b16 %v414
        %v547 = vunpack.c.l.b16 %v415
        %v548 = vunpack.c.l.b16 %v416
        %v549 = vunpack.c.l.b16 %v417
        %v550 = vunpack.c.l.b16 %v418
        %v551 = vunpack.c.l.b16 %v419
        %v552 = vunpack.c.l.b16 %v420
        %v553 = vunpack.c.l.b16 %v421
        %v554 = vunpack.c.l.b16 %v422
        %v555 = vunpack.c.l.b16 %v423
        %v556 = vunpack.c.l.b16 %v424
        %v557 = vunpack.c.l.b16 %v425
        %v558 = vunpack.c.l.b16 %v426
        %v559 = vunpack.c.l.b16 %v427
        %v560 = vunpack.c.l.b16 %v428
        %v561 = vunpack.c.l.b16 %v429
        %v562 = vunpack.c.l.b16 %v430
        %v563 = vunpack.c.l.b16 %v431
        %v564 = vunpack.c.l.b16 %v432
        %v565 = vunpack.c.l.b16 %v433
        %v566 = vunpack.c.l.b16 %v434
        %v567 = vunpack.c.l.b16 %v435
        %v568 = vunpack.c.l.b16 %v436
        %v569 = vunpack.c.l.b16 %v437
        %v570 = vunpack.c.l.b16 %v438
        %v571 = vunpack.c.l.b16 %v439
        %v572 = vunpack.c.l.b16 %v440
        %v573 = vunpack.c.l.b16 %v441
        %v574 = vunpack.c.l.b16 %v442
        %v575 = vunpack.c.l.b16 %v443
        %v576 = vunpack.c.l.b16 %v444
        %v577 = vunpack.c.l.b16 %v445
        %v578 = vunpack.c.l.b16 %v446
        %v579 = vunpack.c.l.b16 %v447
        %v580 = vpack.c.b16 %v517, %v516
        %v581 = vpack.c.b16 %v519, %v518
        %v582 = vpack.c.b16 %v521, %v520
        %v583 = vpack.c.b16 %v523, %v522
        %v584 = vpack.c.b16 %v525, %v524
        %v585 = vpack.c.b16 %v527, %v526
        %v586 = vpack.c.b16 %v529, %v528
        %v587 = vpack.c.b16 %v531, %v530
        %v588 = vpack.c.b16 %v533, %v532
        %v589 = vpack.c.b16 %v535, %v534
        %v590 = vpack.c.b16 %v537, %v536
        %v591 = vpack.c.b16 %v539, %v538
        %v592 = vpack.c.b16 %v541, %v540
        %v593 = vpack.c.b16 %v543, %v542
        %v594 = vpack.c.b16 %v545, %v544
        %v595 = vpack.c.b16 %v547, %v546
        %v596 = vpack.c.b16 %v549, %v548
        %v597 = vpack.c.b16 %v551, %v550
        %v598 = vpack.c.b16 %v553, %v552
        %v599 = vpack.c.b16 %v555, %v554
        %v600 = vpack.c.b16 %v557, %v556
        %v601 = vpack.c.b16 %v559, %v558
        %v602 = vpack.c.b16 %v561, %v560
        %v603 = vpack.c.b16 %v563, %v562
        %v604 = vpack.c.b16 %v565, %v564
        %v605 = vpack.c.b16 %v567, %v566
        %v606 = vpack.c.b16 %v569, %v568
        %v607 = vpack.c.b16 %v571, %v570
        %v608 = vpack.c.b16 %v573, %v572
        %v609 = vpack.c.b16 %v575, %v574
        %v610 = vpack.c.b16 %v577, %v576
        %v611 = vpack.c.b16 %v579, %v578
        %v616 = vunpack.c.l.b16 %v448
        %v617 = vunpack.c.l.b16 %v449
        %v618 = vunpack.c.l.b16 %v450
        %v619 = vunpack.c.l.b16 %v451
        %v620 = vpack.c.b16 %v617, %v616
        %v621 = vpack.c.b16 %v619, %v618
        %vm623 = vcmask 220160
        %v625 = vsel %vm623, %v580, 0
        %v628 = vsel %vm623, %v581, 0
        %v631 = vsel %vm623, %v582, 0
        %v634 = vsel %vm623, %v583, 0
        %v637 = vsel %vm623, %v584, 0
        %v640 = vsel %vm623, %v585, 0
        %v643 = vsel %vm623, %v586, 0
        %v646 = vsel %vm623, %v587, 0
        %v649 = vsel %vm623, %v588, 0
        %v652 = vsel %vm623, %v589, 0
        %v655 = vsel %vm623, %v590, 0
        %v658 = vsel %vm623, %v591, 0
        %v661 = vsel %vm623, %v592, 0
        %v664 = vsel %vm623, %v593, 0
        %v667 = vsel %vm623, %v594, 0
        %v670 = vsel %vm623, %v595, 0
        %v673 = vsel %vm623, %v596, 0
        %v676 = vsel %vm623, %v597, 0
        %v679 = vsel %vm623, %v598, 0
        %v682 = vsel %vm623, %v599, 0
        %v685 = vsel %vm623, %v600, 0
        %v688 = vsel %vm623, %v601, 0
        %v691 = vsel %vm623, %v602, 0
        %v694 = vsel %vm623, %v603, 0
        %v697 = vsel %vm623, %v604, 0
        %v700 = vsel %vm623, %v605, 0
        %v703 = vsel %vm623, %v606, 0
        %v706 = vsel %vm623, %v607, 0
        %v709 = vsel %vm623, %v608, 0
        %v712 = vsel %vm623, %v609, 0
        %v715 = vsel %vm623, %v610, 0
        %v718 = vsel %vm623, %v611, 0
        %vm720 = vcmask 1044480
        %vm721 = vcmask 1045504
        %v722 = vsel %vm720, 4294967295, 65535
        %v723 = vsel %vm721, %v722, 0
        %v725 = vand.u32 %v621, %v723
        %727 = vmatprep.subr.bf16.mxu0 0
        %728 = vmatpush1.bf16.msra.mxu0 0
        %729 = vmatprep.subr.bf16.mxu0 0
        %730 = vmatpush1.bf16.msra.mxu0 0
        %731 = vmatprep.subr.bf16.mxu0 0
        %732 = vmatpush1.bf16.msra.mxu0 0
        %733 = vmatprep.subr.bf16.mxu0 0
        %734 = vmatpush1.bf16.msra.mxu0 0
        %735 = vmatprep.subr.bf16.mxu0 0
        %736 = vmatpush1.bf16.msra.mxu0 0
        %737 = vmatprep.subr.bf16.mxu0 0
        %738 = vmatpush1.bf16.msra.mxu0 0
        %739 = vmatprep.subr.bf16.mxu0 0
        %740 = vmatpush1.bf16.msra.mxu0 %v725
        %741 = vmatprep.subr.bf16.mxu0 0
        %742 = vmatpush1.bf16.msra.mxu0 %v620
        %743 = vmatprep.subr.bf16.mxu0 0
        %744 = vmatpush2.bf16.msra.mxu0 0
        %745 = vmatprep.subr.bf16.mxu0 0
        %746 = vmatpush2.bf16.msra.mxu0 0
        %747 = vmatprep.subr.bf16.mxu0 0
        %748 = vmatpush2.bf16.msra.mxu0 0
        %749 = vmatprep.subr.bf16.mxu0 0
        %750 = vmatpush2.bf16.msra.mxu0 0
        %751 = vmatprep.subr.bf16.mxu0 0
        %752 = vmatpush2.bf16.msra.mxu0 0
        %753 = vmatprep.subr.bf16.mxu0 0
        %754 = vmatpush2.bf16.msra.mxu0 0
        %755 = vmatprep.subr.bf16.mxu0 0
        %756 = vmatpush2.bf16.msra.mxu0 0
        %757 = vmatprep.subr.bf16.mxu0 0
        %758 = vmatpush2.bf16.msra.mxu0 0
        %759 = vmatprep.mubr.bf16.mxu0 0
        %760 = vmatmul.mubr.bf16.gmra.mxu0 %v625
        %v761 = vpop.f32.mrf.mxu0
        %v762 = vadd.f32 0.0, %v761
        %v763 = vpop.f32.mrf.mxu0
        %v764 = vpop.f32.mrf.mxu0
        %v765 = vadd.f32 0.0, %v764
        %v766 = vpop.f32.mrf.mxu0
        %767 = vmatprep.mubr.bf16.mxu0 0
        %768 = vmatmul.mubr.bf16.gmra.mxu0 %v628
        %v769 = vpop.f32.mrf.mxu0
        %v770 = vadd.f32 0.0, %v769
        %v771 = vpop.f32.mrf.mxu0
        %v772 = vpop.f32.mrf.mxu0
        %v773 = vadd.f32 0.0, %v772
        %v774 = vpop.f32.mrf.mxu0
        %775 = vmatprep.mubr.bf16.mxu0 0
        %776 = vmatmul.mubr.bf16.gmra.mxu0 %v631
        %v777 = vpop.f32.mrf.mxu0
        %v778 = vadd.f32 0.0, %v777
        %v779 = vpop.f32.mrf.mxu0
        %v780 = vpop.f32.mrf.mxu0
        %v781 = vadd.f32 0.0, %v780
        %v782 = vpop.f32.mrf.mxu0
        %783 = vmatprep.mubr.bf16.mxu0 0
        %784 = vmatmul.mubr.bf16.gmra.mxu0 %v634
        %v785 = vpop.f32.mrf.mxu0
        %v786 = vadd.f32 0.0, %v785
        %v787 = vpop.f32.mrf.mxu0
        %v788 = vpop.f32.mrf.mxu0
        %v789 = vadd.f32 0.0, %v788
        %v790 = vpop.f32.mrf.mxu0
        %791 = vmatprep.mubr.bf16.mxu0 0
        %792 = vmatmul.mubr.bf16.gmra.mxu0 %v637
        %v793 = vpop.f32.mrf.mxu0
        %v794 = vadd.f32 0.0, %v793
        %v795 = vpop.f32.mrf.mxu0
        %v796 = vpop.f32.mrf.mxu0
        %v797 = vadd.f32 0.0, %v796
        %v798 = vpop.f32.mrf.mxu0
        %799 = vmatprep.mubr.bf16.mxu0 0
        %800 = vmatmul.mubr.bf16.gmra.mxu0 %v640
        %v801 = vpop.f32.mrf.mxu0
        %v802 = vadd.f32 0.0, %v801
        %v803 = vpop.f32.mrf.mxu0
        %v804 = vpop.f32.mrf.mxu0
        %v805 = vadd.f32 0.0, %v804
        %v806 = vpop.f32.mrf.mxu0
        %807 = vmatprep.mubr.bf16.mxu0 0
        %808 = vmatmul.mubr.bf16.gmra.mxu0 %v643
        %v809 = vpop.f32.mrf.mxu0
        %v810 = vadd.f32 0.0, %v809
        %v811 = vpop.f32.mrf.mxu0
        %v812 = vpop.f32.mrf.mxu0
        %v813 = vadd.f32 0.0, %v812
        %v814 = vpop.f32.mrf.mxu0
        %815 = vmatprep.mubr.bf16.mxu0 0
        %816 = vmatmul.mubr.bf16.gmra.mxu0 %v646
        %v817 = vpop.f32.mrf.mxu0
        %v818 = vadd.f32 0.0, %v817
        %v819 = vpop.f32.mrf.mxu0
        %v820 = vpop.f32.mrf.mxu0
        %v821 = vadd.f32 0.0, %v820
        %v822 = vpop.f32.mrf.mxu0
        %823 = vmatprep.mubr.bf16.mxu0 0
        %824 = vmatmul.mubr.bf16.gmra.mxu0 %v649
        %v825 = vpop.f32.mrf.mxu0
        %v826 = vadd.f32 0.0, %v825
        %v827 = vpop.f32.mrf.mxu0
        %v828 = vpop.f32.mrf.mxu0
        %v829 = vadd.f32 0.0, %v828
        %v830 = vpop.f32.mrf.mxu0
        %831 = vmatprep.mubr.bf16.mxu0 0
        %832 = vmatmul.mubr.bf16.gmra.mxu0 %v652
        %v833 = vpop.f32.mrf.mxu0
        %v834 = vadd.f32 0.0, %v833
        %v835 = vpop.f32.mrf.mxu0
        %v836 = vpop.f32.mrf.mxu0
        %v837 = vadd.f32 0.0, %v836
        %v838 = vpop.f32.mrf.mxu0
        %839 = vmatprep.mubr.bf16.mxu0 0
        %840 = vmatmul.mubr.bf16.gmra.mxu0 %v655
        %v841 = vpop.f32.mrf.mxu0
        %v842 = vadd.f32 0.0, %v841
        %v843 = vpop.f32.mrf.mxu0
        %v844 = vpop.f32.mrf.mxu0
        %v845 = vadd.f32 0.0, %v844
        %v846 = vpop.f32.mrf.mxu0
        %847 = vmatprep.mubr.bf16.mxu0 0
        %848 = vmatmul.mubr.bf16.gmra.mxu0 %v658
        %v849 = vpop.f32.mrf.mxu0
        %v850 = vadd.f32 0.0, %v849
        %v851 = vpop.f32.mrf.mxu0
        %v852 = vpop.f32.mrf.mxu0
        %v853 = vadd.f32 0.0, %v852
        %v854 = vpop.f32.mrf.mxu0
        %855 = vmatprep.mubr.bf16.mxu0 0
        %856 = vmatmul.mubr.bf16.gmra.mxu0 %v661
        %v857 = vpop.f32.mrf.mxu0
        %v858 = vadd.f32 0.0, %v857
        %v859 = vpop.f32.mrf.mxu0
        %v860 = vpop.f32.mrf.mxu0
        %v861 = vadd.f32 0.0, %v860
        %v862 = vpop.f32.mrf.mxu0
        %863 = vmatprep.mubr.bf16.mxu0 0
        %864 = vmatmul.mubr.bf16.gmra.mxu0 %v664
        %v865 = vpop.f32.mrf.mxu0
        %v866 = vadd.f32 0.0, %v865
        %v867 = vpop.f32.mrf.mxu0
        %v868 = vpop.f32.mrf.mxu0
        %v869 = vadd.f32 0.0, %v868
        %v870 = vpop.f32.mrf.mxu0
        %871 = vmatprep.mubr.bf16.mxu0 0
        %872 = vmatmul.mubr.bf16.gmra.mxu0 %v667
        %v873 = vpop.f32.mrf.mxu0
        %v874 = vadd.f32 0.0, %v873
        %v875 = vpop.f32.mrf.mxu0
        %v876 = vpop.f32.mrf.mxu0
        %v877 = vadd.f32 0.0, %v876
        %v878 = vpop.f32.mrf.mxu0
        %879 = vmatprep.mubr.bf16.mxu0 0
        %880 = vmatmul.mubr.bf16.gmra.mxu0 %v670
        %v881 = vpop.f32.mrf.mxu0
        %v882 = vadd.f32 0.0, %v881
        %v883 = vpop.f32.mrf.mxu0
        %v884 = vpop.f32.mrf.mxu0
        %v885 = vadd.f32 0.0, %v884
        %v886 = vpop.f32.mrf.mxu0
        %887 = vmatprep.mubr.bf16.mxu0 0
        %888 = vmatmul.mubr.bf16.gmra.mxu0 %v673
        %v889 = vpop.f32.mrf.mxu0
        %v890 = vadd.f32 0.0, %v889
        %v891 = vpop.f32.mrf.mxu0
        %v892 = vpop.f32.mrf.mxu0
        %v893 = vadd.f32 0.0, %v892
        %v894 = vpop.f32.mrf.mxu0
        %895 = vmatprep.mubr.bf16.mxu0 0
        %896 = vmatmul.mubr.bf16.gmra.mxu0 %v676
        %v897 = vpop.f32.mrf.mxu0
        %v898 = vadd.f32 0.0, %v897
        %v899 = vpop.f32.mrf.mxu0
        %v900 = vpop.f32.mrf.mxu0
        %v901 = vadd.f32 0.0, %v900
        %v902 = vpop.f32.mrf.mxu0
        %903 = vmatprep.mubr.bf16.mxu0 0
        %904 = vmatmul.mubr.bf16.gmra.mxu0 %v679
        %v905 = vpop.f32.mrf.mxu0
        %v906 = vadd.f32 0.0, %v905
        %v907 = vpop.f32.mrf.mxu0
        %v908 = vpop.f32.mrf.mxu0
        %v909 = vadd.f32 0.0, %v908
        %v910 = vpop.f32.mrf.mxu0
        %911 = vmatprep.mubr.bf16.mxu0 0
        %912 = vmatmul.mubr.bf16.gmra.mxu0 %v682
        %v913 = vpop.f32.mrf.mxu0
        %v914 = vadd.f32 0.0, %v913
        %v915 = vpop.f32.mrf.mxu0
        %v916 = vpop.f32.mrf.mxu0
        %v917 = vadd.f32 0.0, %v916
        %v918 = vpop.f32.mrf.mxu0
        %919 = vmatprep.mubr.bf16.mxu0 0
        %920 = vmatmul.mubr.bf16.gmra.mxu0 %v685
        %v921 = vpop.f32.mrf.mxu0
        %v922 = vadd.f32 0.0, %v921
        %v923 = vpop.f32.mrf.mxu0
        %v924 = vpop.f32.mrf.mxu0
        %v925 = vadd.f32 0.0, %v924
        %v926 = vpop.f32.mrf.mxu0
        %927 = vmatprep.mubr.bf16.mxu0 0
        %928 = vmatmul.mubr.bf16.gmra.mxu0 %v688
        %v929 = vpop.f32.mrf.mxu0
        %v930 = vadd.f32 0.0, %v929
        %v931 = vpop.f32.mrf.mxu0
        %v932 = vpop.f32.mrf.mxu0
        %v933 = vadd.f32 0.0, %v932
        %v934 = vpop.f32.mrf.mxu0
        %935 = vmatprep.mubr.bf16.mxu0 0
        %936 = vmatmul.mubr.bf16.gmra.mxu0 %v691
        %v937 = vpop.f32.mrf.mxu0
        %v938 = vadd.f32 0.0, %v937
        %v939 = vpop.f32.mrf.mxu0
        %v940 = vpop.f32.mrf.mxu0
        %v941 = vadd.f32 0.0, %v940
        %v942 = vpop.f32.mrf.mxu0
        %943 = vmatprep.mubr.bf16.mxu0 0
        %944 = vmatmul.mubr.bf16.gmra.mxu0 %v694
        %v945 = vpop.f32.mrf.mxu0
        %v946 = vadd.f32 0.0, %v945
        %v947 = vpop.f32.mrf.mxu0
        %v948 = vpop.f32.mrf.mxu0
        %v949 = vadd.f32 0.0, %v948
        %v950 = vpop.f32.mrf.mxu0
        %951 = vmatprep.mubr.bf16.mxu0 0
        %952 = vmatmul.mubr.bf16.gmra.mxu0 %v697
        %v953 = vpop.f32.mrf.mxu0
        %v954 = vadd.f32 0.0, %v953
        %v955 = vpop.f32.mrf.mxu0
        %v956 = vpop.f32.mrf.mxu0
        %v957 = vadd.f32 0.0, %v956
        %v958 = vpop.f32.mrf.mxu0
        %959 = vmatprep.mubr.bf16.mxu0 0
        %960 = vmatmul.mubr.bf16.gmra.mxu0 %v700
        %v961 = vpop.f32.mrf.mxu0
        %v962 = vadd.f32 0.0, %v961
        %v963 = vpop.f32.mrf.mxu0
        %v964 = vpop.f32.mrf.mxu0
        %v965 = vadd.f32 0.0, %v964
        %v966 = vpop.f32.mrf.mxu0
        %967 = vmatprep.mubr.bf16.mxu0 0
        %968 = vmatmul.mubr.bf16.gmra.mxu0 %v703
        %v969 = vpop.f32.mrf.mxu0
        %v970 = vadd.f32 0.0, %v969
        %v971 = vpop.f32.mrf.mxu0
        %v972 = vpop.f32.mrf.mxu0
        %v973 = vadd.f32 0.0, %v972
        %v974 = vpop.f32.mrf.mxu0
        %975 = vmatprep.mubr.bf16.mxu0 0
        %976 = vmatmul.mubr.bf16.gmra.mxu0 %v706
        %v977 = vpop.f32.mrf.mxu0
        %v978 = vadd.f32 0.0, %v977
        %v979 = vpop.f32.mrf.mxu0
        %v980 = vpop.f32.mrf.mxu0
        %v981 = vadd.f32 0.0, %v980
        %v982 = vpop.f32.mrf.mxu0
        %983 = vmatprep.mubr.bf16.mxu0 0
        %984 = vmatmul.mubr.bf16.gmra.mxu0 %v709
        %v985 = vpop.f32.mrf.mxu0
        %v986 = vadd.f32 0.0, %v985
        %v987 = vpop.f32.mrf.mxu0
        %v988 = vpop.f32.mrf.mxu0
        %v989 = vadd.f32 0.0, %v988
        %v990 = vpop.f32.mrf.mxu0
        %991 = vmatprep.mubr.bf16.mxu0 0
        %992 = vmatmul.mubr.bf16.gmra.mxu0 %v712
        %v993 = vpop.f32.mrf.mxu0
        %v994 = vadd.f32 0.0, %v993
        %v995 = vpop.f32.mrf.mxu0
        %v996 = vpop.f32.mrf.mxu0
        %v997 = vadd.f32 0.0, %v996
        %v998 = vpop.f32.mrf.mxu0
        %999 = vmatprep.mubr.bf16.mxu0 0
        %1000 = vmatmul.mubr.bf16.gmra.mxu0 %v715
        %v1001 = vpop.f32.mrf.mxu0
        %v1002 = vadd.f32 0.0, %v1001
        %v1003 = vpop.f32.mrf.mxu0
        %v1004 = vpop.f32.mrf.mxu0
        %v1005 = vadd.f32 0.0, %v1004
        %v1006 = vpop.f32.mrf.mxu0
        %1007 = vmatprep.mubr.bf16.mxu0 0
        %1008 = vmatmul.mubr.bf16.gmra.mxu0 %v718
        %v1009 = vpop.f32.mrf.mxu0
        %v1010 = vadd.f32 0.0, %v1009
        %v1011 = vpop.f32.mrf.mxu0
        %v1012 = vpop.f32.mrf.mxu0
        %v1013 = vadd.f32 0.0, %v1012
        %v1014 = vpop.f32.mrf.mxu0
        %1015 = vdwg.mxu0
        %v1016 = vadd.f32 %v320, %v762
        %v1017 = vadd.f32 %v321, %v765
        %v1018 = vadd.f32 %v322, %v770
        %v1019 = vadd.f32 %v323, %v773
        %v1020 = vadd.f32 %v324, %v778
        %v1021 = vadd.f32 %v325, %v781
        %v1022 = vadd.f32 %v326, %v786
        %v1023 = vadd.f32 %v327, %v789
        %v1024 = vadd.f32 %v328, %v794
        %v1025 = vadd.f32 %v329, %v797
        %v1026 = vadd.f32 %v330, %v802
        %v1027 = vadd.f32 %v331, %v805
        %v1028 = vadd.f32 %v332, %v810
        %v1029 = vadd.f32 %v333, %v813
        %v1030 = vadd.f32 %v334, %v818
        %v1031 = vadd.f32 %v335, %v821
        %v1032 = vadd.f32 %v336, %v826
        %v1033 = vadd.f32 %v337, %v829
        %v1034 = vadd.f32 %v338, %v834
        %v1035 = vadd.f32 %v339, %v837
        %v1036 = vadd.f32 %v340, %v842
        %v1037 = vadd.f32 %v341, %v845
        %v1038 = vadd.f32 %v342, %v850
        %v1039 = vadd.f32 %v343, %v853
        %v1040 = vadd.f32 %v344, %v858
        %v1041 = vadd.f32 %v345, %v861
        %v1042 = vadd.f32 %v346, %v866
        %v1043 = vadd.f32 %v347, %v869
        %v1044 = vadd.f32 %v348, %v874
        %v1045 = vadd.f32 %v349, %v877
        %v1046 = vadd.f32 %v350, %v882
        %v1047 = vadd.f32 %v351, %v885
        %v1048 = vadd.f32 %v352, %v890
        %v1049 = vadd.f32 %v353, %v893
        %v1050 = vadd.f32 %v354, %v898
        %v1051 = vadd.f32 %v355, %v901
        %v1052 = vadd.f32 %v356, %v906
        %v1053 = vadd.f32 %v357, %v909
        %v1054 = vadd.f32 %v358, %v914
        %v1055 = vadd.f32 %v359, %v917
        %v1056 = vadd.f32 %v360, %v922
        %v1057 = vadd.f32 %v361, %v925
        %v1058 = vadd.f32 %v362, %v930
        %v1059 = vadd.f32 %v363, %v933
        %v1060 = vadd.f32 %v364, %v938
        %v1061 = vadd.f32 %v365, %v941
        %v1062 = vadd.f32 %v366, %v946
        %v1063 = vadd.f32 %v367, %v949
        %v1064 = vadd.f32 %v368, %v954
        %v1065 = vadd.f32 %v369, %v957
        %v1066 = vadd.f32 %v370, %v962
        %v1067 = vadd.f32 %v371, %v965
        %v1068 = vadd.f32 %v372, %v970
        %v1069 = vadd.f32 %v373, %v973
        %v1070 = vadd.f32 %v374, %v978
        %v1071 = vadd.f32 %v375, %v981
        %v1072 = vadd.f32 %v376, %v986
        %v1073 = vadd.f32 %v377, %v989
        %v1074 = vadd.f32 %v378, %v994
        %v1075 = vadd.f32 %v379, %v997
        %v1076 = vadd.f32 %v380, %v1002
        %v1077 = vadd.f32 %v381, %v1005
        %v1078 = vadd.f32 %v382, %v1010
        %v1079 = vadd.f32 %v383, %v1013
        %1080 = vst [vmem:[#allocation2] sm:$0xff] %v1016
        %1081 = vst [vmem:[#allocation2 + $0x8] sm:$0xff] %v1017
        %1082 = vst [vmem:[#allocation2 + $0x10] sm:$0xff] %v1018
        %1083 = vst [vmem:[#allocation2 + $0x18] sm:$0xff] %v1019
        %1084 = vst [vmem:[#allocation2 + $0x20] sm:$0xff] %v1020
        %1085 = vst [vmem:[#allocation2 + $0x28] sm:$0xff] %v1021
        %1086 = vst [vmem:[#allocation2 + $0x30] sm:$0xff] %v1022
        %1087 = vst [vmem:[#allocation2 + $0x38] sm:$0xff] %v1023
        %1088 = vst [vmem:[#allocation2 + $0x40] sm:$0xff] %v1024
        %1089 = vst [vmem:[#allocation2 + $0x48] sm:$0xff] %v1025
        %1090 = vst [vmem:[#allocation2 + $0x50] sm:$0xff] %v1026
        %1091 = vst [vmem:[#allocation2 + $0x58] sm:$0xff] %v1027
        %1092 = vst [vmem:[#allocation2 + $0x60] sm:$0xff] %v1028
        %1093 = vst [vmem:[#allocation2 + $0x68] sm:$0xff] %v1029
        %1094 = vst [vmem:[#allocation2 + $0x70] sm:$0xff] %v1030
        %1095 = vst [vmem:[#allocation2 + $0x78] sm:$0xff] %v1031
        %1096 = vst [vmem:[#allocation2 + $0x80] sm:$0xff] %v1032
        %1097 = vst [vmem:[#allocation2 + $0x88] sm:$0xff] %v1033
        %1098 = vst [vmem:[#allocation2 + $0x90] sm:$0xff] %v1034
        %1099 = vst [vmem:[#allocation2 + $0x98] sm:$0xff] %v1035
        %1100 = vst [vmem:[#allocation2 + $0xa0] sm:$0xff] %v1036
        %1101 = vst [vmem:[#allocation2 + $0xa8] sm:$0xff] %v1037
        %1102 = vst [vmem:[#allocation2 + $0xb0] sm:$0xff] %v1038
        %1103 = vst [vmem:[#allocation2 + $0xb8] sm:$0xff] %v1039
        %1104 = vst [vmem:[#allocation2 + $0xc0] sm:$0xff] %v1040
        %1105 = vst [vmem:[#allocation2 + $0xc8] sm:$0xff] %v1041
        %1106 = vst [vmem:[#allocation2 + $0xd0] sm:$0xff] %v1042
        %1107 = vst [vmem:[#allocation2 + $0xd8] sm:$0xff] %v1043
        %1108 = vst [vmem:[#allocation2 + $0xe0] sm:$0xff] %v1044
        %1109 = vst [vmem:[#allocation2 + $0xe8] sm:$0xff] %v1045
        %1110 = vst [vmem:[#allocation2 + $0xf0] sm:$0xff] %v1046
        %1111 = vst [vmem:[#allocation2 + $0xf8] sm:$0xff] %v1047
        %1112 = vst [vmem:[#allocation2 + $0x100] sm:$0xff] %v1048
        %1113 = vst [vmem:[#allocation2 + $0x108] sm:$0xff] %v1049
        %1114 = vst [vmem:[#allocation2 + $0x110] sm:$0xff] %v1050
        %1115 = vst [vmem:[#allocation2 + $0x118] sm:$0xff] %v1051
        %1116 = vst [vmem:[#allocation2 + $0x120] sm:$0xff] %v1052
        %1117 = vst [vmem:[#allocation2 + $0x128] sm:$0xff] %v1053
        %1118 = vst [vmem:[#allocation2 + $0x130] sm:$0xff] %v1054
        %1119 = vst [vmem:[#allocation2 + $0x138] sm:$0xff] %v1055
        %1120 = vst [vmem:[#allocation2 + $0x140] sm:$0xff] %v1056
        %1121 = vst [vmem:[#allocation2 + $0x148] sm:$0xff] %v1057
        %1122 = vst [vmem:[#allocation2 + $0x150] sm:$0xff] %v1058
        %1123 = vst [vmem:[#allocation2 + $0x158] sm:$0xff] %v1059
        %1124 = vst [vmem:[#allocation2 + $0x160] sm:$0xff] %v1060
        %1125 = vst [vmem:[#allocation2 + $0x168] sm:$0xff] %v1061
        %1126 = vst [vmem:[#allocation2 + $0x170] sm:$0xff] %v1062
        %1127 = vst [vmem:[#allocation2 + $0x178] sm:$0xff] %v1063
        %1128 = vst [vmem:[#allocation2 + $0x180] sm:$0xff] %v1064
        %1129 = vst [vmem:[#allocation2 + $0x188] sm:$0xff] %v1065
        %1130 = vst [vmem:[#allocation2 + $0x190] sm:$0xff] %v1066
        %1131 = vst [vmem:[#allocation2 + $0x198] sm:$0xff] %v1067
        %1132 = vst [vmem:[#allocation2 + $0x1a0] sm:$0xff] %v1068
        %1133 = vst [vmem:[#allocation2 + $0x1a8] sm:$0xff] %v1069
        %1134 = vst [vmem:[#allocation2 + $0x1b0] sm:$0xff] %v1070
        %1135 = vst [vmem:[#allocation2 + $0x1b8] sm:$0xff] %v1071
        %1136 = vst [vmem:[#allocation2 + $0x1c0] sm:$0xff] %v1072
        %1137 = vst [vmem:[#allocation2 + $0x1c8] sm:$0xff] %v1073
        %1138 = vst [vmem:[#allocation2 + $0x1d0] sm:$0xff] %v1074
        %1139 = vst [vmem:[#allocation2 + $0x1d8] sm:$0xff] %v1075
        %1140 = vst [vmem:[#allocation2 + $0x1e0] sm:$0xff] %v1076
        %1141 = vst [vmem:[#allocation2 + $0x1e8] sm:$0xff] %v1077
        %1142 = vst [vmem:[#allocation2 + $0x1f0] sm:$0xff] %v1078
        %1143 = vst [vmem:[#allocation2 + $0x1f8] sm:$0xff] %v1079
        // Predicated region
        $region37: #{tpu_custom_call.1} parent=31 // pred_check
          %p1144 = pneg %p252
        $region38: #{tpu_custom_call.1} parent=31 // pred_check_branch
          %1146 = sbr.rel (%p1144) target = $region40
        $region39: #{tpu_custom_call.1} parent=31 // pred_region
          %v1147 = vld [vmem:[#allocation2] sm:$0xff]
          %v1148 = vld [vmem:[#allocation2 + $0x8] sm:$0xff]
          %v1149 = vld [vmem:[#allocation2 + $0x10] sm:$0xff]
          %v1150 = vld [vmem:[#allocation2 + $0x18] sm:$0xff]
          %v1151 = vld [vmem:[#allocation2 + $0x20] sm:$0xff]
          %v1152 = vld [vmem:[#allocation2 + $0x28] sm:$0xff]
          %v1153 = vld [vmem:[#allocation2 + $0x30] sm:$0xff]
          %v1154 = vld [vmem:[#allocation2 + $0x38] sm:$0xff]
          %v1155 = vld [vmem:[#allocation2 + $0x40] sm:$0xff]
          %v1156 = vld [vmem:[#allocation2 + $0x48] sm:$0xff]
          %v1157 = vld [vmem:[#allocation2 + $0x50] sm:$0xff]
          %v1158 = vld [vmem:[#allocation2 + $0x58] sm:$0xff]
          %v1159 = vld [vmem:[#allocation2 + $0x60] sm:$0xff]
          %v1160 = vld [vmem:[#allocation2 + $0x68] sm:$0xff]
          %v1161 = vld [vmem:[#allocation2 + $0x70] sm:$0xff]
          %v1162 = vld [vmem:[#allocation2 + $0x78] sm:$0xff]
          %v1163 = vld [vmem:[#allocation2 + $0x80] sm:$0xff]
          %v1164 = vld [vmem:[#allocation2 + $0x88] sm:$0xff]
          %v1165 = vld [vmem:[#allocation2 + $0x90] sm:$0xff]
          %v1166 = vld [vmem:[#allocation2 + $0x98] sm:$0xff]
          %v1167 = vld [vmem:[#allocation2 + $0xa0] sm:$0xff]
          %v1168 = vld [vmem:[#allocation2 + $0xa8] sm:$0xff]
          %v1169 = vld [vmem:[#allocation2 + $0xb0] sm:$0xff]
          %v1170 = vld [vmem:[#allocation2 + $0xb8] sm:$0xff]
          %v1171 = vld [vmem:[#allocation2 + $0xc0] sm:$0xff]
          %v1172 = vld [vmem:[#allocation2 + $0xc8] sm:$0xff]
          %v1173 = vld [vmem:[#allocation2 + $0xd0] sm:$0xff]
          %v1174 = vld [vmem:[#allocation2 + $0xd8] sm:$0xff]
          %v1175 = vld [vmem:[#allocation2 + $0xe0] sm:$0xff]
          %v1176 = vld [vmem:[#allocation2 + $0xe8] sm:$0xff]
          %v1177 = vld [vmem:[#allocation2 + $0xf0] sm:$0xff]
          %v1178 = vld [vmem:[#allocation2 + $0xf8] sm:$0xff]
          %v1179 = vld [vmem:[#allocation2 + $0x100] sm:$0xff]
          %v1180 = vld [vmem:[#allocation2 + $0x108] sm:$0xff]
          %v1181 = vld [vmem:[#allocation2 + $0x110] sm:$0xff]
          %v1182 = vld [vmem:[#allocation2 + $0x118] sm:$0xff]
          %v1183 = vld [vmem:[#allocation2 + $0x120] sm:$0xff]
          %v1184 = vld [vmem:[#allocation2 + $0x128] sm:$0xff]
          %v1185 = vld [vmem:[#allocation2 + $0x130] sm:$0xff]
          %v1186 = vld [vmem:[#allocation2 + $0x138] sm:$0xff]
          %v1187 = vld [vmem:[#allocation2 + $0x140] sm:$0xff]
          %v1188 = vld [vmem:[#allocation2 + $0x148] sm:$0xff]
          %v1189 = vld [vmem:[#allocation2 + $0x150] sm:$0xff]
          %v1190 = vld [vmem:[#allocation2 + $0x158] sm:$0xff]
          %v1191 = vld [vmem:[#allocation2 + $0x160] sm:$0xff]
          %v1192 = vld [vmem:[#allocation2 + $0x168] sm:$0xff]
          %v1193 = vld [vmem:[#allocation2 + $0x170] sm:$0xff]
          %v1194 = vld [vmem:[#allocation2 + $0x178] sm:$0xff]
          %v1195 = vld [vmem:[#allocation2 + $0x180] sm:$0xff]
          %v1196 = vld [vmem:[#allocation2 + $0x188] sm:$0xff]
          %v1197 = vld [vmem:[#allocation2 + $0x190] sm:$0xff]
          %v1198 = vld [vmem:[#allocation2 + $0x198] sm:$0xff]
          %v1199 = vld [vmem:[#allocation2 + $0x1a0] sm:$0xff]
          %v1200 = vld [vmem:[#allocation2 + $0x1a8] sm:$0xff]
          %v1201 = vld [vmem:[#allocation2 + $0x1b0] sm:$0xff]
          %v1202 = vld [vmem:[#allocation2 + $0x1b8] sm:$0xff]
          %v1203 = vld [vmem:[#allocation2 + $0x1c0] sm:$0xff]
          %v1204 = vld [vmem:[#allocation2 + $0x1c8] sm:$0xff]
          %v1205 = vld [vmem:[#allocation2 + $0x1d0] sm:$0xff]
          %v1206 = vld [vmem:[#allocation2 + $0x1d8] sm:$0xff]
          %v1207 = vld [vmem:[#allocation2 + $0x1e0] sm:$0xff]
          %v1208 = vld [vmem:[#allocation2 + $0x1e8] sm:$0xff]
          %v1209 = vld [vmem:[#allocation2 + $0x1f0] sm:$0xff]
          %v1210 = vld [vmem:[#allocation2 + $0x1f8] sm:$0xff]
          %v1211 = vld [vmem:[%s249] sm:$0x1]
          %v1213 = vlaneseq
          %v1214 = vshrl.u32 %v1213, 7
          %v1215 = vsub.s32 0, %v1214
          %v1216 = vrot.slane %v1211, %v1215
          %v1218 = vadd.f32 %v1147, %v1216
          %v1219 = vadd.f32 %v1148, %v1216
          %v1220 = vadd.f32 %v1149, %v1216
          %v1221 = vadd.f32 %v1150, %v1216
          %v1222 = vadd.f32 %v1151, %v1216
          %v1223 = vadd.f32 %v1152, %v1216
          %v1224 = vadd.f32 %v1153, %v1216
          %v1225 = vadd.f32 %v1154, %v1216
          %v1226 = vadd.f32 %v1155, %v1216
          %v1227 = vadd.f32 %v1156, %v1216
          %v1228 = vadd.f32 %v1157, %v1216
          %v1229 = vadd.f32 %v1158, %v1216
          %v1230 = vadd.f32 %v1159, %v1216
          %v1231 = vadd.f32 %v1160, %v1216
          %v1232 = vadd.f32 %v1161, %v1216
          %v1233 = vadd.f32 %v1162, %v1216
          %v1234 = vadd.f32 %v1163, %v1216
          %v1235 = vadd.f32 %v1164, %v1216
          %v1236 = vadd.f32 %v1165, %v1216
          %v1237 = vadd.f32 %v1166, %v1216
          %v1238 = vadd.f32 %v1167, %v1216
          %v1239 = vadd.f32 %v1168, %v1216
          %v1240 = vadd.f32 %v1169, %v1216
          %v1241 = vadd.f32 %v1170, %v1216
          %v1242 = vadd.f32 %v1171, %v1216
          %v1243 = vadd.f32 %v1172, %v1216
          %v1244 = vadd.f32 %v1173, %v1216
          %v1245 = vadd.f32 %v1174, %v1216
          %v1246 = vadd.f32 %v1175, %v1216
          %v1247 = vadd.f32 %v1176, %v1216
          %v1248 = vadd.f32 %v1177, %v1216
          %v1249 = vadd.f32 %v1178, %v1216
          %v1250 = vadd.f32 %v1179, %v1216
          %v1251 = vadd.f32 %v1180, %v1216
          %v1252 = vadd.f32 %v1181, %v1216
          %v1253 = vadd.f32 %v1182, %v1216
          %v1254 = vadd.f32 %v1183, %v1216
          %v1255 = vadd.f32 %v1184, %v1216
          %v1256 = vadd.f32 %v1185, %v1216
          %v1257 = vadd.f32 %v1186, %v1216
          %v1258 = vadd.f32 %v1187, %v1216
          %v1259 = vadd.f32 %v1188, %v1216
          %v1260 = vadd.f32 %v1189, %v1216
          %v1261 = vadd.f32 %v1190, %v1216
          %v1262 = vadd.f32 %v1191, %v1216
          %v1263 = vadd.f32 %v1192, %v1216
          %v1264 = vadd.f32 %v1193, %v1216
          %v1265 = vadd.f32 %v1194, %v1216
          %v1266 = vadd.f32 %v1195, %v1216
          %v1267 = vadd.f32 %v1196, %v1216
          %v1268 = vadd.f32 %v1197, %v1216
          %v1269 = vadd.f32 %v1198, %v1216
          %v1270 = vadd.f32 %v1199, %v1216
          %v1271 = vadd.f32 %v1200, %v1216
          %v1272 = vadd.f32 %v1201, %v1216
          %v1273 = vadd.f32 %v1202, %v1216
          %v1274 = vadd.f32 %v1203, %v1216
          %v1275 = vadd.f32 %v1204, %v1216
          %v1276 = vadd.f32 %v1205, %v1216
          %v1277 = vadd.f32 %v1206, %v1216
          %v1278 = vadd.f32 %v1207, %v1216
          %v1279 = vadd.f32 %v1208, %v1216
          %v1280 = vadd.f32 %v1209, %v1216
          %v1281 = vadd.f32 %v1210, %v1216
          %v1282 = vmul.f32 %v1218, 0.01
          %v1283 = vmul.f32 %v1219, 0.01
          %v1284 = vmul.f32 %v1220, 0.01
          %v1285 = vmul.f32 %v1221, 0.01
          %v1286 = vmul.f32 %v1222, 0.01
          %v1287 = vmul.f32 %v1223, 0.01
          %v1288 = vmul.f32 %v1224, 0.01
          %v1289 = vmul.f32 %v1225, 0.01
          %v1290 = vmul.f32 %v1226, 0.01
          %v1291 = vmul.f32 %v1227, 0.01
          %v1292 = vmul.f32 %v1228, 0.01
          %v1293 = vmul.f32 %v1229, 0.01
          %v1294 = vmul.f32 %v1230, 0.01
          %v1295 = vmul.f32 %v1231, 0.01
          %v1296 = vmul.f32 %v1232, 0.01
          %v1297 = vmul.f32 %v1233, 0.01
          %v1298 = vmul.f32 %v1234, 0.01
          %v1299 = vmul.f32 %v1235, 0.01
          %v1300 = vmul.f32 %v1236, 0.01
          %v1301 = vmul.f32 %v1237, 0.01
          %v1302 = vmul.f32 %v1238, 0.01
          %v1303 = vmul.f32 %v1239, 0.01
          %v1304 = vmul.f32 %v1240, 0.01
          %v1305 = vmul.f32 %v1241, 0.01
          %v1306 = vmul.f32 %v1242, 0.01
          %v1307 = vmul.f32 %v1243, 0.01
          %v1308 = vmul.f32 %v1244, 0.01
          %v1309 = vmul.f32 %v1245, 0.01
          %v1310 = vmul.f32 %v1246, 0.01
          %v1311 = vmul.f32 %v1247, 0.01
          %v1312 = vmul.f32 %v1248, 0.01
          %v1313 = vmul.f32 %v1249, 0.01
          %v1314 = vmul.f32 %v1250, 0.01
          %v1315 = vmul.f32 %v1251, 0.01
          %v1316 = vmul.f32 %v1252, 0.01
          %v1317 = vmul.f32 %v1253, 0.01
          %v1318 = vmul.f32 %v1254, 0.01
          %v1319 = vmul.f32 %v1255, 0.01
          %v1320 = vmul.f32 %v1256, 0.01
          %v1321 = vmul.f32 %v1257, 0.01
          %v1322 = vmul.f32 %v1258, 0.01
          %v1323 = vmul.f32 %v1259, 0.01
          %v1324 = vmul.f32 %v1260, 0.01
          %v1325 = vmul.f32 %v1261, 0.01
          %v1326 = vmul.f32 %v1262, 0.01
          %v1327 = vmul.f32 %v1263, 0.01
          %v1328 = vmul.f32 %v1264, 0.01
          %v1329 = vmul.f32 %v1265, 0.01
          %v1330 = vmul.f32 %v1266, 0.01
          %v1331 = vmul.f32 %v1267, 0.01
          %v1332 = vmul.f32 %v1268, 0.01
          %v1333 = vmul.f32 %v1269, 0.01
          %v1334 = vmul.f32 %v1270, 0.01
          %v1335 = vmul.f32 %v1271, 0.01
          %v1336 = vmul.f32 %v1272, 0.01
          %v1337 = vmul.f32 %v1273, 0.01
          %v1338 = vmul.f32 %v1274, 0.01
          %v1339 = vmul.f32 %v1275, 0.01
          %v1340 = vmul.f32 %v1276, 0.01
          %v1341 = vmul.f32 %v1277, 0.01
          %v1342 = vmul.f32 %v1278, 0.01
          %v1343 = vmul.f32 %v1279, 0.01
          %v1344 = vmul.f32 %v1280, 0.01
          %v1345 = vmul.f32 %v1281, 0.01
          %v1346 = vmax.f32 %v1218, %v1282
          %v1347 = vmax.f32 %v1219, %v1283
          %v1348 = vmax.f32 %v1220, %v1284
          %v1349 = vmax.f32 %v1221, %v1285
          %v1350 = vmax.f32 %v1222, %v1286
          %v1351 = vmax.f32 %v1223, %v1287
          %v1352 = vmax.f32 %v1224, %v1288
          %v1353 = vmax.f32 %v1225, %v1289
          %v1354 = vmax.f32 %v1226, %v1290
          %v1355 = vmax.f32 %v1227, %v1291
          %v1356 = vmax.f32 %v1228, %v1292
          %v1357 = vmax.f32 %v1229, %v1293
          %v1358 = vmax.f32 %v1230, %v1294
          %v1359 = vmax.f32 %v1231, %v1295
          %v1360 = vmax.f32 %v1232, %v1296
          %v1361 = vmax.f32 %v1233, %v1297
          %v1362 = vmax.f32 %v1234, %v1298
          %v1363 = vmax.f32 %v1235, %v1299
          %v1364 = vmax.f32 %v1236, %v1300
          %v1365 = vmax.f32 %v1237, %v1301
          %v1366 = vmax.f32 %v1238, %v1302
          %v1367 = vmax.f32 %v1239, %v1303
          %v1368 = vmax.f32 %v1240, %v1304
          %v1369 = vmax.f32 %v1241, %v1305
          %v1370 = vmax.f32 %v1242, %v1306
          %v1371 = vmax.f32 %v1243, %v1307
          %v1372 = vmax.f32 %v1244, %v1308
          %v1373 = vmax.f32 %v1245, %v1309
          %v1374 = vmax.f32 %v1246, %v1310
          %v1375 = vmax.f32 %v1247, %v1311
          %v1376 = vmax.f32 %v1248, %v1312
          %v1377 = vmax.f32 %v1249, %v1313
          %v1378 = vmax.f32 %v1250, %v1314
          %v1379 = vmax.f32 %v1251, %v1315
          %v1380 = vmax.f32 %v1252, %v1316
          %v1381 = vmax.f32 %v1253, %v1317
          %v1382 = vmax.f32 %v1254, %v1318
          %v1383 = vmax.f32 %v1255, %v1319
          %v1384 = vmax.f32 %v1256, %v1320
          %v1385 = vmax.f32 %v1257, %v1321
          %v1386 = vmax.f32 %v1258, %v1322
          %v1387 = vmax.f32 %v1259, %v1323
          %v1388 = vmax.f32 %v1260, %v1324
          %v1389 = vmax.f32 %v1261, %v1325
          %v1390 = vmax.f32 %v1262, %v1326
          %v1391 = vmax.f32 %v1263, %v1327
          %v1392 = vmax.f32 %v1264, %v1328
          %v1393 = vmax.f32 %v1265, %v1329
          %v1394 = vmax.f32 %v1266, %v1330
          %v1395 = vmax.f32 %v1267, %v1331
          %v1396 = vmax.f32 %v1268, %v1332
          %v1397 = vmax.f32 %v1269, %v1333
          %v1398 = vmax.f32 %v1270, %v1334
          %v1399 = vmax.f32 %v1271, %v1335
          %v1400 = vmax.f32 %v1272, %v1336
          %v1401 = vmax.f32 %v1273, %v1337
          %v1402 = vmax.f32 %v1274, %v1338
          %v1403 = vmax.f32 %v1275, %v1339
          %v1404 = vmax.f32 %v1276, %v1340
          %v1405 = vmax.f32 %v1277, %v1341
          %v1406 = vmax.f32 %v1278, %v1342
          %v1407 = vmax.f32 %v1279, %v1343
          %v1408 = vmax.f32 %v1280, %v1344
          %v1409 = vmax.f32 %v1281, %v1345
          %v1410 = vpack.c.bf16 %v1347, %v1346
          %v1411 = vpack.c.bf16 %v1349, %v1348
          %v1412 = vpack.c.bf16 %v1351, %v1350
          %v1413 = vpack.c.bf16 %v1353, %v1352
          %v1414 = vpack.c.bf16 %v1355, %v1354
          %v1415 = vpack.c.bf16 %v1357, %v1356
          %v1416 = vpack.c.bf16 %v1359, %v1358
          %v1417 = vpack.c.bf16 %v1361, %v1360
          %v1418 = vpack.c.bf16 %v1363, %v1362
          %v1419 = vpack.c.bf16 %v1365, %v1364
          %v1420 = vpack.c.bf16 %v1367, %v1366
          %v1421 = vpack.c.bf16 %v1369, %v1368
          %v1422 = vpack.c.bf16 %v1371, %v1370
          %v1423 = vpack.c.bf16 %v1373, %v1372
          %v1424 = vpack.c.bf16 %v1375, %v1374
          %v1425 = vpack.c.bf16 %v1377, %v1376
          %v1426 = vpack.c.bf16 %v1379, %v1378
          %v1427 = vpack.c.bf16 %v1381, %v1380
          %v1428 = vpack.c.bf16 %v1383, %v1382
          %v1429 = vpack.c.bf16 %v1385, %v1384
          %v1430 = vpack.c.bf16 %v1387, %v1386
          %v1431 = vpack.c.bf16 %v1389, %v1388
          %v1432 = vpack.c.bf16 %v1391, %v1390
          %v1433 = vpack.c.bf16 %v1393, %v1392
          %v1434 = vpack.c.bf16 %v1395, %v1394
          %v1435 = vpack.c.bf16 %v1397, %v1396
          %v1436 = vpack.c.bf16 %v1399, %v1398
          %v1437 = vpack.c.bf16 %v1401, %v1400
          %v1438 = vpack.c.bf16 %v1403, %v1402
          %v1439 = vpack.c.bf16 %v1405, %v1404
          %v1440 = vpack.c.bf16 %v1407, %v1406
          %v1441 = vpack.c.bf16 %v1409, %v1408
          %v1474 = vunpack.c.l.b16 %v1410
          %v1475 = vunpack.c.h.b16 %v1410
          %v1476 = vunpack.c.l.b16 %v1411
          %v1477 = vunpack.c.h.b16 %v1411
          %v1478 = vunpack.c.l.b16 %v1412
          %v1479 = vunpack.c.h.b16 %v1412
          %v1480 = vunpack.c.l.b16 %v1413
          %v1481 = vunpack.c.h.b16 %v1413
          %v1482 = vunpack.c.l.b16 %v1414
          %v1483 = vunpack.c.h.b16 %v1414
          %v1484 = vunpack.c.l.b16 %v1415
          %v1485 = vunpack.c.h.b16 %v1415
          %v1486 = vunpack.c.l.b16 %v1416
          %v1487 = vunpack.c.h.b16 %v1416
          %v1488 = vunpack.c.l.b16 %v1417
          %v1489 = vunpack.c.h.b16 %v1417
          %v1490 = vunpack.c.l.b16 %v1418
          %v1491 = vunpack.c.h.b16 %v1418
          %v1492 = vunpack.c.l.b16 %v1419
          %v1493 = vunpack.c.h.b16 %v1419
          %v1494 = vunpack.c.l.b16 %v1420
          %v1495 = vunpack.c.h.b16 %v1420
          %v1496 = vunpack.c.l.b16 %v1421
          %v1497 = vunpack.c.h.b16 %v1421
          %v1498 = vunpack.c.l.b16 %v1422
          %v1499 = vunpack.c.h.b16 %v1422
          %v1500 = vunpack.c.l.b16 %v1423
          %v1501 = vunpack.c.h.b16 %v1423
          %v1502 = vunpack.c.l.b16 %v1424
          %v1503 = vunpack.c.h.b16 %v1424
          %v1504 = vunpack.c.l.b16 %v1425
          %v1505 = vunpack.c.h.b16 %v1425
          %v1506 = vunpack.c.l.b16 %v1426
          %v1507 = vunpack.c.h.b16 %v1426
          %v1508 = vunpack.c.l.b16 %v1427
          %v1509 = vunpack.c.h.b16 %v1427
          %v1510 = vunpack.c.l.b16 %v1428
          %v1511 = vunpack.c.h.b16 %v1428
          %v1512 = vunpack.c.l.b16 %v1429
          %v1513 = vunpack.c.h.b16 %v1429
          %v1514 = vunpack.c.l.b16 %v1430
          %v1515 = vunpack.c.h.b16 %v1430
          %v1516 = vunpack.c.l.b16 %v1431
          %v1517 = vunpack.c.h.b16 %v1431
          %v1518 = vunpack.c.l.b16 %v1432
          %v1519 = vunpack.c.h.b16 %v1432
          %v1520 = vunpack.c.l.b16 %v1433
          %v1521 = vunpack.c.h.b16 %v1433
          %v1522 = vunpack.c.l.b16 %v1434
          %v1523 = vunpack.c.h.b16 %v1434
          %v1524 = vunpack.c.l.b16 %v1435
          %v1525 = vunpack.c.h.b16 %v1435
          %v1526 = vunpack.c.l.b16 %v1436
          %v1527 = vunpack.c.h.b16 %v1436
          %v1528 = vunpack.c.l.b16 %v1437
          %v1529 = vunpack.c.h.b16 %v1437
          %v1530 = vunpack.c.l.b16 %v1438
          %v1531 = vunpack.c.h.b16 %v1438
          %v1532 = vunpack.c.l.b16 %v1439
          %v1533 = vunpack.c.h.b16 %v1439
          %v1534 = vunpack.c.l.b16 %v1440
          %v1535 = vunpack.c.h.b16 %v1440
          %v1536 = vunpack.c.l.b16 %v1441
          %v1537 = vunpack.c.h.b16 %v1441
          %v1538 = vpack.c.b16 %v1474, %v1474
          %v1539 = vpack.c.b16 %v1475, %v1475
          %v1540 = vpack.c.b16 %v1476, %v1476
          %v1541 = vpack.c.b16 %v1477, %v1477
          %v1542 = vpack.c.b16 %v1478, %v1478
          %v1543 = vpack.c.b16 %v1479, %v1479
          %v1544 = vpack.c.b16 %v1480, %v1480
          %v1545 = vpack.c.b16 %v1481, %v1481
          %v1546 = vpack.c.b16 %v1482, %v1482
          %v1547 = vpack.c.b16 %v1483, %v1483
          %v1548 = vpack.c.b16 %v1484, %v1484
          %v1549 = vpack.c.b16 %v1485, %v1485
          %v1550 = vpack.c.b16 %v1486, %v1486
          %v1551 = vpack.c.b16 %v1487, %v1487
          %v1552 = vpack.c.b16 %v1488, %v1488
          %v1553 = vpack.c.b16 %v1489, %v1489
          %v1554 = vpack.c.b16 %v1490, %v1490
          %v1555 = vpack.c.b16 %v1491, %v1491
          %v1556 = vpack.c.b16 %v1492, %v1492
          %v1557 = vpack.c.b16 %v1493, %v1493
          %v1558 = vpack.c.b16 %v1494, %v1494
          %v1559 = vpack.c.b16 %v1495, %v1495
          %v1560 = vpack.c.b16 %v1496, %v1496
          %v1561 = vpack.c.b16 %v1497, %v1497
          %v1562 = vpack.c.b16 %v1498, %v1498
          %v1563 = vpack.c.b16 %v1499, %v1499
          %v1564 = vpack.c.b16 %v1500, %v1500
          %v1565 = vpack.c.b16 %v1501, %v1501
          %v1566 = vpack.c.b16 %v1502, %v1502
          %v1567 = vpack.c.b16 %v1503, %v1503
          %v1568 = vpack.c.b16 %v1504, %v1504
          %v1569 = vpack.c.b16 %v1505, %v1505
          %v1570 = vpack.c.b16 %v1506, %v1506
          %v1571 = vpack.c.b16 %v1507, %v1507
          %v1572 = vpack.c.b16 %v1508, %v1508
          %v1573 = vpack.c.b16 %v1509, %v1509
          %v1574 = vpack.c.b16 %v1510, %v1510
          %v1575 = vpack.c.b16 %v1511, %v1511
          %v1576 = vpack.c.b16 %v1512, %v1512
          %v1577 = vpack.c.b16 %v1513, %v1513
          %v1578 = vpack.c.b16 %v1514, %v1514
          %v1579 = vpack.c.b16 %v1515, %v1515
          %v1580 = vpack.c.b16 %v1516, %v1516
          %v1581 = vpack.c.b16 %v1517, %v1517
          %v1582 = vpack.c.b16 %v1518, %v1518
          %v1583 = vpack.c.b16 %v1519, %v1519
          %v1584 = vpack.c.b16 %v1520, %v1520
          %v1585 = vpack.c.b16 %v1521, %v1521
          %v1586 = vpack.c.b16 %v1522, %v1522
          %v1587 = vpack.c.b16 %v1523, %v1523
          %v1588 = vpack.c.b16 %v1524, %v1524
          %v1589 = vpack.c.b16 %v1525, %v1525
          %v1590 = vpack.c.b16 %v1526, %v1526
          %v1591 = vpack.c.b16 %v1527, %v1527
          %v1592 = vpack.c.b16 %v1528, %v1528
          %v1593 = vpack.c.b16 %v1529, %v1529
          %v1594 = vpack.c.b16 %v1530, %v1530
          %v1595 = vpack.c.b16 %v1531, %v1531
          %v1596 = vpack.c.b16 %v1532, %v1532
          %v1597 = vpack.c.b16 %v1533, %v1533
          %v1598 = vpack.c.b16 %v1534, %v1534
          %v1599 = vpack.c.b16 %v1535, %v1535
          %v1600 = vpack.c.b16 %v1536, %v1536
          %v1601 = vpack.c.b16 %v1537, %v1537
          %1666 = vst [vmem:[%s228] sm:$0xf] %v1538
          %1667 = vst [vmem:[%s228 + $0x4] sm:$0xf] %v1539
          %1668 = vst [vmem:[%s228 + $0x8] sm:$0xf] %v1540
          %1669 = vst [vmem:[%s228 + $0xc] sm:$0xf] %v1541
          %1670 = vst [vmem:[%s228 + $0x10] sm:$0xf] %v1542
          %1671 = vst [vmem:[%s228 + $0x14] sm:$0xf] %v1543
          %1672 = vst [vmem:[%s228 + $0x18] sm:$0xf] %v1544
          %1673 = vst [vmem:[%s228 + $0x1c] sm:$0xf] %v1545
          %1674 = vst [vmem:[%s228 + $0x20] sm:$0xf] %v1546
          %1675 = vst [vmem:[%s228 + $0x24] sm:$0xf] %v1547
          %1676 = vst [vmem:[%s228 + $0x28] sm:$0xf] %v1548
          %1677 = vst [vmem:[%s228 + $0x2c] sm:$0xf] %v1549
          %1678 = vst [vmem:[%s228 + $0x30] sm:$0xf] %v1550
          %1679 = vst [vmem:[%s228 + $0x34] sm:$0xf] %v1551
          %1680 = vst [vmem:[%s228 + $0x38] sm:$0xf] %v1552
          %1681 = vst [vmem:[%s228 + $0x3c] sm:$0xf] %v1553
          %1682 = vst [vmem:[%s228 + $0x40] sm:$0xf] %v1554
          %1683 = vst [vmem:[%s228 + $0x44] sm:$0xf] %v1555
          %1684 = vst [vmem:[%s228 + $0x48] sm:$0xf] %v1556
          %1685 = vst [vmem:[%s228 + $0x4c] sm:$0xf] %v1557
          %1686 = vst [vmem:[%s228 + $0x50] sm:$0xf] %v1558
          %1687 = vst [vmem:[%s228 + $0x54] sm:$0xf] %v1559
          %1688 = vst [vmem:[%s228 + $0x58] sm:$0xf] %v1560
          %1689 = vst [vmem:[%s228 + $0x5c] sm:$0xf] %v1561
          %1690 = vst [vmem:[%s228 + $0x60] sm:$0xf] %v1562
          %1691 = vst [vmem:[%s228 + $0x64] sm:$0xf] %v1563
          %1692 = vst [vmem:[%s228 + $0x68] sm:$0xf] %v1564
          %1693 = vst [vmem:[%s228 + $0x6c] sm:$0xf] %v1565
          %1694 = vst [vmem:[%s228 + $0x70] sm:$0xf] %v1566
          %1695 = vst [vmem:[%s228 + $0x74] sm:$0xf] %v1567
          %1696 = vst [vmem:[%s228 + $0x78] sm:$0xf] %v1568
          %1697 = vst [vmem:[%s228 + $0x7c] sm:$0xf] %v1569
          %1698 = vst [vmem:[%s228 + $0x80] sm:$0xf] %v1570
          %1699 = vst [vmem:[%s228 + $0x84] sm:$0xf] %v1571
          %1700 = vst [vmem:[%s228 + $0x88] sm:$0xf] %v1572
          %1701 = vst [vmem:[%s228 + $0x8c] sm:$0xf] %v1573
          %1702 = vst [vmem:[%s228 + $0x90] sm:$0xf] %v1574
          %1703 = vst [vmem:[%s228 + $0x94] sm:$0xf] %v1575
          %1704 = vst [vmem:[%s228 + $0x98] sm:$0xf] %v1576
          %1705 = vst [vmem:[%s228 + $0x9c] sm:$0xf] %v1577
          %1706 = vst [vmem:[%s228 + $0xa0] sm:$0xf] %v1578
          %1707 = vst [vmem:[%s228 + $0xa4] sm:$0xf] %v1579
          %1708 = vst [vmem:[%s228 + $0xa8] sm:$0xf] %v1580
          %1709 = vst [vmem:[%s228 + $0xac] sm:$0xf] %v1581
          %1710 = vst [vmem:[%s228 + $0xb0] sm:$0xf] %v1582
          %1711 = vst [vmem:[%s228 + $0xb4] sm:$0xf] %v1583
          %1712 = vst [vmem:[%s228 + $0xb8] sm:$0xf] %v1584
          %1713 = vst [vmem:[%s228 + $0xbc] sm:$0xf] %v1585
          %1714 = vst [vmem:[%s228 + $0xc0] sm:$0xf] %v1586
          %1715 = vst [vmem:[%s228 + $0xc4] sm:$0xf] %v1587
          %1716 = vst [vmem:[%s228 + $0xc8] sm:$0xf] %v1588
          %1717 = vst [vmem:[%s228 + $0xcc] sm:$0xf] %v1589
          %1718 = vst [vmem:[%s228 + $0xd0] sm:$0xf] %v1590
          %1719 = vst [vmem:[%s228 + $0xd4] sm:$0xf] %v1591
          %1720 = vst [vmem:[%s228 + $0xd8] sm:$0xf] %v1592
          %1721 = vst [vmem:[%s228 + $0xdc] sm:$0xf] %v1593
          %1722 = vst [vmem:[%s228 + $0xe0] sm:$0xf] %v1594
          %1723 = vst [vmem:[%s228 + $0xe4] sm:$0xf] %v1595
          %1724 = vst [vmem:[%s228 + $0xe8] sm:$0xf] %v1596
          %1725 = vst [vmem:[%s228 + $0xec] sm:$0xf] %v1597
          %1726 = vst [vmem:[%s228 + $0xf0] sm:$0xf] %v1598
          %1727 = vst [vmem:[%s228 + $0xf4] sm:$0xf] %v1599
          %1728 = vst [vmem:[%s228 + $0xf8] sm:$0xf] %v1600
          %1729 = vst [vmem:[%s228 + $0xfc] sm:$0xf] %v1601
        $region40: #{tpu_custom_call.1} parent=31 // pred_fallthru
          _
        %s1730 = sand.u32 %s128, 1
        %s1731 = scalar_lea.sflag [#allocation4], %s1730
        %s1732 = sand.u32 %s128, 1
        %s1733 = smul.addr %s1732, 256
        %s1734 = scalar_lea.vmem [#allocation3], %s1733
        // Predicated region
        $region41: #{tpu_custom_call.1} parent=31 // pred_check
          %p1735 = pneg %p138
        $region42: #{tpu_custom_call.1} parent=31 // pred_check_branch
          %1737 = sbr.rel (%p1735) target = $region44
        $region43: #{tpu_custom_call.1} parent=31 // pred_region
          %s1738 = smul.u32 64, %s22
          %s1740 = ssub.s32 4096, 4096
          %1741 = vsyncadd %s1731, %s1740
          %s1742 = sadd.s32 %s23, %s1738
          %s1743 = smul.addr %s1742, 64
          %s1744 = scalar_lea.hbm %s3, %s1743
          %s1745 = sshll.u32 %s1734, 4
          %s1746 = int_to_ptr.vmem [resolvable:$true] %s1745
          %1751 = dma.vmem_to_hbm [thread:$0]  %s1746, 4096, %s1744, %s1731, 64, 64, 4
        $region44: #{tpu_custom_call.1} parent=31 // pred_fallthru
          _
      $region32: #{tpu_custom_call.1} parent=5 // pred_fallthru
        _
      %p1752 = scmp.le.s32.totalorder 2, %s12
      // Predicated region
      $region45: #{tpu_custom_call.1} parent=5 // pred_check
        %p1753 = pneg %p1752
      $region46: #{tpu_custom_call.1} parent=5 // pred_check_branch
        %1755 = sbr.rel (%p1753) target = $region48
      $region47: #{tpu_custom_call.1} parent=5 // pred_region
        %s1756 = ssub.s32 %s12, 2
        // Predicated region
        $region49: #{tpu_custom_call.1} parent=47 // pred_check
          %p1757 = pneg %p144
        $region50: #{tpu_custom_call.1} parent=47 // pred_check_branch
          %1759 = sbr.rel (%p1757) target = $region52
        $region51: #{tpu_custom_call.1} parent=47 // pred_region
          %s1760 = sand.u32 %s129, 1
          %s1761 = scalar_lea.sflag [#allocation4], %s1760
          %s1762 = sand.u32 %s129, 1
          %s1763 = smul.addr %s1762, 256
          %s1764 = scalar_lea.vmem [#allocation3], %s1763
          %1765 = dma.done %s1761, 4096
        $region52: #{tpu_custom_call.1} parent=47 // pred_fallthru
          _
      $region48: #{tpu_custom_call.1} parent=5 // pred_fallthru
        _
    $region6: #{tpu_custom_call.1} parent=1 // loop_footer
      %s16 = sadd.s32 1, %s12
    $region7: #{tpu_custom_call.1} parent=1 // loop_footer_branch
      %11 = sbr.rel target = $region3
    $region8: #{tpu_custom_call.1} parent=1 // loop_exit
      _
    %1766 = vsyncpa [#allocation4], 1
    %s1767 = scalar_lea.sflag [#allocation4], 1
    %1768 = vsyncpa %s1767, 1

</llo_original>
